<compile_context>
chip_gen: v7x
topology: tpu7x:2x2x1
jax: 0.10.0
libtpu: 0.0.40
codegen_flags: <defaults>
</compile_context>

<pallas_src>
import functools

import numpy as np

import jax
import jax.numpy as jnp
from jax import lax
from jax.experimental import pallas as pl
from jax.experimental.pallas import tpu as pltpu

K = 7          # spatial-attention kernel size (7x7, padding 3)
PAD = 3


def _pick_chunk(C):
    """Channel-chunk size: full C when tiny, else a multiple of 8 dividing C."""
    if C <= 8:
        return C
    for cand in (32, 24, 16, 8):
        if C % cand == 0:
            return cand
    return C


def _pick_bt(B, per_sample_bytes, target_bytes=2 << 20):
    """Batch tile: ~target-sized blocks, divisor of B, >= 2 grid steps if possible."""
    bt = max(1, min(B, target_bytes // max(1, per_sample_bytes)))
    while B % bt:
        bt -= 1
    if B // bt < 2 and B >= 2:
        bt = max(1, B // 2)
        while B % bt:
            bt -= 1
    return max(1, bt)


def cbam_kernel(x_ref, w_ref, bc_ref, wmask_ref, o_ref, *, W, HW, cc, use_mxu):
    # x_ref / o_ref: (Bt, C, HWp) lane-dense block (HWp on lanes, C on sublanes).
    Bt, C, HWp = x_ref.shape
    n_chunks = C // cc
    inv_hw = 1.0 / HW
    inv_c = 1.0 / C

    # ---------------- Channel attention ----------------
    # Pass 1: global average pool per channel (lane reduction), chunked over C
    # so only (Bt, cc, HWp) is live in vregs at a time.
    avg_parts = []
    for ci in range(n_chunks):
        c0 = ci * cc
        xc = x_ref[:, c0:c0 + cc, :].astype(jnp.float32)      # (Bt, cc, HWp)
        avg_parts.append(jnp.sum(xc, axis=-1) * inv_hw)       # (Bt, cc)
    avg = avg_parts[0] if n_chunks == 1 else jnp.concatenate(avg_parts, axis=1)

    bias = bc_ref[...]                                        # (1, C)
    if use_mxu:
        # w_ref holds wc^T = (C_in, C_out); cast to bf16 for prod sizes (TODO).
        logits = jnp.dot(avg, w_ref[...],
                         preferred_element_type=jnp.float32) + bias
    else:
        # VPU path for small C: broadcast-multiply + lane reduction.
        # w_ref holds wc = (C_out, C_in); avg stays lane-resident.
        logits = jnp.sum(avg[:, None, :] * w_ref[...][None, :, :],
                         axis=-1) + bias                       # (Bt, C)
    ca = 1.0 / (1.0 + jnp.exp(-logits))                        # (Bt, C), tiny

    # Pass 2: write x*ca into the output block and build channel mean / max.
    csum = jnp.zeros((Bt, HWp), jnp.float32)
    cmax = jnp.full((Bt, HWp), -jnp.inf, jnp.float32)
    for ci in range(n_chunks):
        c0 = ci * cc
        xc = x_ref[:, c0:c0 + cc, :].astype(jnp.float32)       # (Bt, cc, HWp)
        xca = xc * ca[:, c0:c0 + cc][:, :, None]
        o_ref[:, c0:c0 + cc, :] = xca.astype(o_ref.dtype)
        csum = csum + jnp.sum(xca, axis=1)
        cmax = jnp.maximum(cmax, jnp.max(xca, axis=1))
    cmean = csum * inv_c                                       # (Bt, HWp)

    # ---------------- Spatial attention ----------------
    # 7x7 conv (2 -> 1 channels, zero padding) as 49 lane rolls.  Mean and max
    # planes are stacked along sublanes -> ONE roll per offset; the padding
    # masks are pre-folded into wmask, so each tap is a single FMA.  Two
    # rotating partial accumulators break the serial vadd chain.
    stk = jnp.concatenate([cmean, cmax], axis=0)               # (2*Bt, HWp)
    acc0 = jnp.zeros((2 * Bt, HWp), jnp.float32)
    acc1 = jnp.zeros((2 * Bt, HWp), jnp.float32)
    for idx in range(K * K):
        a = idx // K - PAD
        b = idx % K - PAD
        shift = (-(a * W + b)) % HWp                            # out[k] <- in[k+off]
        rolled = pltpu.roll(stk, shift, 1) if shift else stk   # (2*Bt, HWp)
        wv = wmask_ref[idx]                                     # (2*Bt, HWp) f32
        if idx % 2 == 0:
            acc0 = acc0 + wv * rolled
        else:
            acc1 = acc1 + wv * rolled
    acc_full = acc0 + acc1
    acc = acc_full[:Bt, :] + acc_full[Bt:, :]                  # (Bt, HWp)

    # Sigmoid: exp on the EUP + approximate reciprocal on the EUP (no VALU div).
    sa = pl.reciprocal(1.0 + jnp.exp(-acc), approx=True)       # (Bt, HWp)

    # Pass 3: scale the stored x*ca by the spatial map, chunked over C.
    for ci in range(n_chunks):
        c0 = ci * cc
        yc = o_ref[:, c0:c0 + cc, :].astype(jnp.float32)
        o_ref[:, c0:c0 + cc, :] = (yc * sa[:, None, :]).astype(o_ref.dtype)


def cbam(x, wc, bc, ws, *, bt=None, hbm_dtype=None):
    """x: (B, C, H, W); wc: (C, C) fc weight; bc: (C,) fc bias; ws: (1, 2, K, K)."""
    B, C, H, W = x.shape
    HW = H * W
    HWp = ((HW + 127) // 128) * 128          # lane-dense (pad HW to 128 mult)

    cd = x.dtype if hbm_dtype is None else jnp.dtype(hbm_dtype)
    itemsize = jnp.dtype(cd).itemsize

    if bt is None:
        bt = _pick_bt(B, C * HWp * itemsize)
    assert B % bt == 0, "batch tile must divide batch"

    # Lane-dense (B, C, HWp) carriage through HBM (optionally bf16).
    x2 = x.reshape(B, C, HW).astype(cd)
    if HWp != HW:
        x2 = jnp.pad(x2, ((0, 0), (0, 0), (0, HWp - HW)))

    use_mxu = C > 64
    # Small C: keep wc as (C_out, C_in) for the VPU path; large C: pass wc^T
    # so the kernel can feed the MXU directly.
    w_fc = (jnp.transpose(wc) if use_mxu else wc).astype(jnp.float32)
    bc2 = bc.reshape(1, C).astype(jnp.float32)

    # Fold the 7x7 conv weights and the zero-padding masks into per-offset
    # masked weight vectors: row block [0, bt) = mean-plane, [bt, 2bt) = max.
    wm = np.asarray(ws, dtype=np.float32).reshape(2, K, K)
    flat = np.arange(HWp)
    row = flat // W
    col = flat % W
    in_img = (flat < HW).astype(np.float32)
    wmask = np.zeros((K * K, 2 * bt, HWp), np.float32)
    for a in range(-PAD, PAD + 1):
        for b in range(-PAD, PAD + 1):
            idx = (a + PAD) * K + (b + PAD)
            valid = ((col >= -b) & (col < W - b) &
                     (row >= -a) & (row < H - a)).astype(np.float32) * in_img
            wmask[idx, :bt, :] = wm[0, a + PAD, b + PAD] * valid
            wmask[idx, bt:, :] = wm[1, a + PAD, b + PAD] * valid
    wmask_j = jnp.asarray(wmask)

    kernel = functools.partial(cbam_kernel, W=W, HW=HW,
                               cc=_pick_chunk(C), use_mxu=use_mxu)

    # VMEM budget: 2 double-buffered x/out blocks + folded weights + slack.
    block_bytes = bt * C * HWp * itemsize
    need = 4 * block_bytes + 2 * wmask.size * 4 + (4 << 20)
    vmem_limit = int(min(max(need, 32 << 20), 48 << 20))

    grid_spec = pltpu.PrefetchScalarGridSpec(
        num_scalar_prefetch=0,
        grid=(B // bt,),
        in_specs=[
            pl.BlockSpec((bt, C, HWp), lambda i: (i, 0, 0)),
            pl.BlockSpec(w_fc.shape, lambda i: (0, 0)),
            pl.BlockSpec((1, C), lambda i: (0, 0)),
            pl.BlockSpec((K * K, 2 * bt, HWp), lambda i: (0, 0, 0)),
            # TODO(synk): sweep pipeline_mode=pl.Buffered(3) on the x spec on
            # v7x if per-step compute turns out shorter than the DMA.
        ],
        out_specs=pl.BlockSpec((bt, C, HWp), lambda i: (i, 0, 0)),
    )

    out = pl.pallas_call(
        kernel,
        out_shape=jax.ShapeDtypeStruct((B, C, HWp), cd),
        grid_spec=grid_spec,
        compiler_params=pltpu.CompilerParams(
            dimension_semantics=("parallel",),
            vmem_limit_bytes=vmem_limit),
    )(x2, w_fc, bc2, wmask_j)

    out = out[..., :HW].reshape(B, C, H, W)
    return out.astype(x.dtype) if hbm_dtype is not None else out


def cbam_ref(x, wc, bc, ws):
    """Pure-JAX reference mirroring the PyTorch CBAM module."""
    avg = jnp.mean(x, axis=(2, 3))                       # (B, C)
    ca = jax.nn.sigmoid(avg @ wc.T + bc)[:, :, None, None]
    x_ca = x * ca
    m = jnp.mean(x_ca, axis=1, keepdims=True)
    mx = jnp.max(x_ca, axis=1, keepdims=True)
    cat = jnp.concatenate([m, mx], axis=1)               # (B, 2, H, W)
    sa = lax.conv_general_dilated(
        cat, ws, window_strides=(1, 1), padding=((PAD, PAD), (PAD, PAD)),
        dimension_numbers=("NCHW", "OIHW", "NCHW"))
    return x_ca * jax.nn.sigmoid(sa)


if __name__ == "__main__":
    B, C, H, W = 2, 4, 16, 16
    key = jax.random.PRNGKey(0)
    k1, k2, k3, k4 = jax.random.split(key, 4)

    x = jax.random.normal(k1, (B, C, H, W), jnp.float32)
    # Deterministic synthetic parameters (shapes from the module __init__):
    wc = jax.random.normal(k2, (C, C), jnp.float32) * 0.1       # fc: Conv2d(C,C,1) weight
    bc = jax.random.normal(k3, (C,), jnp.float32) * 0.1         # fc bias
    ws = jax.random.normal(k4, (1, 2, K, K), jnp.float32) * 0.1  # cv1: Conv2d(2,1,7) weight

    out = jax.block_until_ready(cbam(x, wc, bc, ws))
    ref = cbam_ref(x, wc, bc, ws)

    assert out.shape == (B, C, H, W) and out.dtype == x.dtype
    # Tolerance loosened slightly vs exact f32: the spatial sigmoid uses the
    # EUP approximate reciprocal (pl.reciprocal(..., approx=True)).
    assert jnp.allclose(out, ref, rtol=5e-3, atol=5e-3), \
        f"max abs err {jnp.max(jnp.abs(out - ref))}"

    print("KERNEL_OK")
</pallas_src>

<mosaic_0001>
module attributes {stable_mosaic.version = 11 : i64} {
  func.func @cbam_kernel(%arg0: i32, %arg1: memref<1x4x256xf32, #tpu.memory_space<vmem>>, %arg2: memref<4x4xf32, #tpu.memory_space<vmem>>, %arg3: memref<1x4xf32, #tpu.memory_space<vmem>>, %arg4: memref<49x2x256xf32, #tpu.memory_space<vmem>>, %arg5: memref<1x4x256xf32, #tpu.memory_space<vmem>>) attributes {dimension_semantics = [#tpu.dimension_semantics<parallel>], iteration_bounds = array<i64: 2>, scalar_prefetch = 0 : i64, scratch_operands = 0 : i64, tpu.core_type = #tpu.core_type<tc>, window_params = [{transform_indices = @transform_0, window_bounds = array<i64: 1, 4, 256>}, {pipeline_mode = #tpu.pipeline_mode<synchronous>, transform_indices = @transform_1, window_bounds = array<i64: 4, 4>}, {pipeline_mode = #tpu.pipeline_mode<synchronous>, transform_indices = @transform_2, window_bounds = array<i64: 1, 4>}, {pipeline_mode = #tpu.pipeline_mode<synchronous>, transform_indices = @transform_3, window_bounds = array<i64: 49, 2, 256>}, {transform_indices = @transform_4, window_bounds = array<i64: 1, 4, 256>}]} {
    %c0 = arith.constant 0 : index
    %c0_0 = arith.constant 0 : index
    %c0_1 = arith.constant 0 : index
    %0 = vector.load %arg1[%c0, %c0_0, %c0_1] : memref<1x4x256xf32, #tpu.memory_space<vmem>>, vector<1x4x256xf32>
    %cst = arith.constant dense<0.000000e+00> : vector<1x4xf32>
    %1 = vector.multi_reduction <add>, %0, %cst [2] : vector<1x4x256xf32> to vector<1x4xf32>
    %cst_2 = arith.constant 3.906250e-03 : f32
    %2 = vector.broadcast %cst_2 : f32 to vector<1x4xf32>
    %3 = arith.mulf %1, %2 : vector<1x4xf32>
    %c0_3 = arith.constant 0 : index
    %c0_4 = arith.constant 0 : index
    %4 = vector.load %arg3[%c0_3, %c0_4] : memref<1x4xf32, #tpu.memory_space<vmem>>, vector<1x4xf32>
    %5 = vector.shape_cast %3 : vector<1x4xf32> to vector<1x1x4xf32>
    %c0_5 = arith.constant 0 : index
    %c0_6 = arith.constant 0 : index
    %6 = vector.load %arg2[%c0_5, %c0_6] : memref<4x4xf32, #tpu.memory_space<vmem>>, vector<4x4xf32>
    %7 = vector.shape_cast %6 : vector<4x4xf32> to vector<1x4x4xf32>
    %8 = vector.broadcast %5 : vector<1x1x4xf32> to vector<1x4x4xf32>
    %9 = arith.mulf %8, %7 : vector<1x4x4xf32>
    %cst_7 = arith.constant dense<0.000000e+00> : vector<1x4xf32>
    %10 = vector.multi_reduction <add>, %9, %cst_7 [2] : vector<1x4x4xf32> to vector<1x4xf32>
    %11 = arith.addf %10, %4 : vector<1x4xf32>
    %cst_8 = arith.constant 0.000000e+00 : f32
    %12 = vector.broadcast %cst_8 : f32 to vector<1x4xf32>
    %13 = arith.subf %12, %11 : vector<1x4xf32>
    %14 = math.exp %13 : vector<1x4xf32>
    %cst_9 = arith.constant 1.000000e+00 : f32
    %15 = vector.broadcast %cst_9 : f32 to vector<1x4xf32>
    %16 = arith.addf %15, %14 : vector<1x4xf32>
    %cst_10 = arith.constant 1.000000e+00 : f32
    %17 = vector.broadcast %cst_10 : f32 to vector<1x4xf32>
    %18 = arith.divf %17, %16 : vector<1x4xf32>
    %cst_11 = arith.constant 0.000000e+00 : f32
    %19 = vector.broadcast %cst_11 : f32 to vector<1x256xf32>
    %cst_12 = arith.constant 0xFF800000 : f32
    %20 = vector.broadcast %cst_12 : f32 to vector<1x256xf32>
    %c0_13 = arith.constant 0 : index
    %c0_14 = arith.constant 0 : index
    %c0_15 = arith.constant 0 : index
    %21 = vector.load %arg1[%c0_13, %c0_14, %c0_15] : memref<1x4x256xf32, #tpu.memory_space<vmem>>, vector<1x4x256xf32>
    %22 = vector.shape_cast %18 : vector<1x4xf32> to vector<1x4x1xf32>
    %23 = vector.broadcast %22 : vector<1x4x1xf32> to vector<1x4x256xf32>
    %24 = arith.mulf %21, %23 : vector<1x4x256xf32>
    %c0_16 = arith.constant 0 : index
    %c0_17 = arith.constant 0 : index
    %c0_18 = arith.constant 0 : index
    %25 = vector.load %arg5[%c0_16, %c0_17, %c0_18] : memref<1x4x256xf32, #tpu.memory_space<vmem>>, vector<1x4x256xf32>
    tpu.vector_store %arg5[%c0_16, %c0_17, %c0_18], %24 {strides = array<i32>} : memref<1x4x256xf32, #tpu.memory_space<vmem>>, vector<1x4x256xf32>,
    %cst_19 = arith.constant dense<0.000000e+00> : vector<1x256xf32>
    %26 = vector.multi_reduction <add>, %24, %cst_19 [1] : vector<1x4x256xf32> to vector<1x256xf32>
    %27 = arith.addf %19, %26 : vector<1x256xf32>
    %cst_20 = arith.constant dense<0xFF800000> : vector<1x256xf32>
    %28 = vector.multi_reduction <maximumf>, %24, %cst_20 [1] : vector<1x4x256xf32> to vector<1x256xf32>
    %29 = arith.maximumf %20, %28 : vector<1x256xf32>
    %cst_21 = arith.constant 2.500000e-01 : f32
    %30 = vector.broadcast %cst_21 : f32 to vector<1x256xf32>
    %31 = arith.mulf %27, %30 : vector<1x256xf32>
    %32 = tpu.concatenate %31, %29 in 0 : vector<1x256xf32>, vector<1x256xf32> -> vector<2x256xf32>
    %cst_22 = arith.constant 0.000000e+00 : f32
    %33 = vector.broadcast %cst_22 : f32 to vector<2x256xf32>
    %cst_23 = arith.constant 0.000000e+00 : f32
    %34 = vector.broadcast %cst_23 : f32 to vector<2x256xf32>
    %c51_i32 = arith.constant 51 : i32
    %35 = tpu.dynamic_rotate %32 by %c51_i32 dim 1 : vector<2x256xf32>, i32 -> vector<2x256xf32>
    %c0_24 = arith.constant 0 : index
    %c0_25 = arith.constant 0 : index
    %c0_26 = arith.constant 0 : index
    %36 = vector.load %arg4[%c0_24, %c0_25, %c0_26] : memref<49x2x256xf32, #tpu.memory_space<vmem>>, vector<1x2x256xf32>
    %37 = vector.shape_cast %36 : vector<1x2x256xf32> to vector<2x256xf32>
    %38 = arith.mulf %37, %35 : vector<2x256xf32>
    %39 = arith.addf %33, %38 : vector<2x256xf32>
    %c50_i32 = arith.constant 50 : i32
    %40 = tpu.dynamic_rotate %32 by %c50_i32 dim 1 : vector<2x256xf32>, i32 -> vector<2x256xf32>
    %c1 = arith.constant 1 : index
    %c0_27 = arith.constant 0 : index
    %c0_28 = arith.constant 0 : index
    %41 = vector.load %arg4[%c1, %c0_27, %c0_28] : memref<49x2x256xf32, #tpu.memory_space<vmem>>, vector<1x2x256xf32>
    %42 = vector.shape_cast %41 : vector<1x2x256xf32> to vector<2x256xf32>
    %43 = arith.mulf %42, %40 : vector<2x256xf32>
    %44 = arith.addf %34, %43 : vector<2x256xf32>
    %c49_i32 = arith.constant 49 : i32
    %45 = tpu.dynamic_rotate %32 by %c49_i32 dim 1 : vector<2x256xf32>, i32 -> vector<2x256xf32>
    %c2 = arith.constant 2 : index
    %c0_29 = arith.constant 0 : index
    %c0_30 = arith.constant 0 : index
    %46 = vector.load %arg4[%c2, %c0_29, %c0_30] : memref<49x2x256xf32, #tpu.memory_space<vmem>>, vector<1x2x256xf32>
    %47 = vector.shape_cast %46 : vector<1x2x256xf32> to vector<2x256xf32>
    %48 = arith.mulf %47, %45 : vector<2x256xf32>
    %49 = arith.addf %39, %48 : vector<2x256xf32>
    %c48_i32 = arith.constant 48 : i32
    %50 = tpu.dynamic_rotate %32 by %c48_i32 dim 1 : vector<2x256xf32>, i32 -> vector<2x256xf32>
    %c3 = arith.constant 3 : index
    %c0_31 = arith.constant 0 : index
    %c0_32 = arith.constant 0 : index
    %51 = vector.load %arg4[%c3, %c0_31, %c0_32] : memref<49x2x256xf32, #tpu.memory_space<vmem>>, vector<1x2x256xf32>
    %52 = vector.shape_cast %51 : vector<1x2x256xf32> to vector<2x256xf32>
    %53 = arith.mulf %52, %50 : vector<2x256xf32>
    %54 = arith.addf %44, %53 : vector<2x256xf32>
    %c47_i32 = arith.constant 47 : i32
    %55 = tpu.dynamic_rotate %32 by %c47_i32 dim 1 : vector<2x256xf32>, i32 -> vector<2x256xf32>
    %c4 = arith.constant 4 : index
    %c0_33 = arith.constant 0 : index
    %c0_34 = arith.constant 0 : index
    %56 = vector.load %arg4[%c4, %c0_33, %c0_34] : memref<49x2x256xf32, #tpu.memory_space<vmem>>, vector<1x2x256xf32>
    %57 = vector.shape_cast %56 : vector<1x2x256xf32> to vector<2x256xf32>
    %58 = arith.mulf %57, %55 : vector<2x256xf32>
    %59 = arith.addf %49, %58 : vector<2x256xf32>
    %c46_i32 = arith.constant 46 : i32
    %60 = tpu.dynamic_rotate %32 by %c46_i32 dim 1 : vector<2x256xf32>, i32 -> vector<2x256xf32>
    %c5 = arith.constant 5 : index
    %c0_35 = arith.constant 0 : index
    %c0_36 = arith.constant 0 : index
    %61 = vector.load %arg4[%c5, %c0_35, %c0_36] : memref<49x2x256xf32, #tpu.memory_space<vmem>>, vector<1x2x256xf32>
    %62 = vector.shape_cast %61 : vector<1x2x256xf32> to vector<2x256xf32>
    %63 = arith.mulf %62, %60 : vector<2x256xf32>
    %64 = arith.addf %54, %63 : vector<2x256xf32>
    %c45_i32 = arith.constant 45 : i32
    %65 = tpu.dynamic_rotate %32 by %c45_i32 dim 1 : vector<2x256xf32>, i32 -> vector<2x256xf32>
    %c6 = arith.constant 6 : index
    %c0_37 = arith.constant 0 : index
    %c0_38 = arith.constant 0 : index
    %66 = vector.load %arg4[%c6, %c0_37, %c0_38] : memref<49x2x256xf32, #tpu.memory_space<vmem>>, vector<1x2x256xf32>
    %67 = vector.shape_cast %66 : vector<1x2x256xf32> to vector<2x256xf32>
    %68 = arith.mulf %67, %65 : vector<2x256xf32>
    %69 = arith.addf %59, %68 : vector<2x256xf32>
    %c35_i32 = arith.constant 35 : i32
    %70 = tpu.dynamic_rotate %32 by %c35_i32 dim 1 : vector<2x256xf32>, i32 -> vector<2x256xf32>
    %c7 = arith.constant 7 : index
    %c0_39 = arith.constant 0 : index
    %c0_40 = arith.constant 0 : index
    %71 = vector.load %arg4[%c7, %c0_39, %c0_40] : memref<49x2x256xf32, #tpu.memory_space<vmem>>, vector<1x2x256xf32>
    %72 = vector.shape_cast %71 : vector<1x2x256xf32> to vector<2x256xf32>
    %73 = arith.mulf %72, %70 : vector<2x256xf32>
    %74 = arith.addf %64, %73 : vector<2x256xf32>
    %c34_i32 = arith.constant 34 : i32
    %75 = tpu.dynamic_rotate %32 by %c34_i32 dim 1 : vector<2x256xf32>, i32 -> vector<2x256xf32>
    %c8 = arith.constant 8 : index
    %c0_41 = arith.constant 0 : index
    %c0_42 = arith.constant 0 : index
    %76 = vector.load %arg4[%c8, %c0_41, %c0_42] : memref<49x2x256xf32, #tpu.memory_space<vmem>>, vector<1x2x256xf32>
    %77 = vector.shape_cast %76 : vector<1x2x256xf32> to vector<2x256xf32>
    %78 = arith.mulf %77, %75 : vector<2x256xf32>
    %79 = arith.addf %69, %78 : vector<2x256xf32>
    %c33_i32 = arith.constant 33 : i32
    %80 = tpu.dynamic_rotate %32 by %c33_i32 dim 1 : vector<2x256xf32>, i32 -> vector<2x256xf32>
    %c9 = arith.constant 9 : index
    %c0_43 = arith.constant 0 : index
    %c0_44 = arith.constant 0 : index
    %81 = vector.load %arg4[%c9, %c0_43, %c0_44] : memref<49x2x256xf32, #tpu.memory_space<vmem>>, vector<1x2x256xf32>
    %82 = vector.shape_cast %81 : vector<1x2x256xf32> to vector<2x256xf32>
    %83 = arith.mulf %82, %80 : vector<2x256xf32>
    %84 = arith.addf %74, %83 : vector<2x256xf32>
    %c32_i32 = arith.constant 32 : i32
    %85 = tpu.dynamic_rotate %32 by %c32_i32 dim 1 : vector<2x256xf32>, i32 -> vector<2x256xf32>
    %c10 = arith.constant 10 : index
    %c0_45 = arith.constant 0 : index
    %c0_46 = arith.constant 0 : index
    %86 = vector.load %arg4[%c10, %c0_45, %c0_46] : memref<49x2x256xf32, #tpu.memory_space<vmem>>, vector<1x2x256xf32>
    %87 = vector.shape_cast %86 : vector<1x2x256xf32> to vector<2x256xf32>
    %88 = arith.mulf %87, %85 : vector<2x256xf32>
    %89 = arith.addf %79, %88 : vector<2x256xf32>
    %c31_i32 = arith.constant 31 : i32
    %90 = tpu.dynamic_rotate %32 by %c31_i32 dim 1 : vector<2x256xf32>, i32 -> vector<2x256xf32>
    %c11 = arith.constant 11 : index
    %c0_47 = arith.constant 0 : index
    %c0_48 = arith.constant 0 : index
    %91 = vector.load %arg4[%c11, %c0_47, %c0_48] : memref<49x2x256xf32, #tpu.memory_space<vmem>>, vector<1x2x256xf32>
    %92 = vector.shape_cast %91 : vector<1x2x256xf32> to vector<2x256xf32>
    %93 = arith.mulf %92, %90 : vector<2x256xf32>
    %94 = arith.addf %84, %93 : vector<2x256xf32>
    %c30_i32 = arith.constant 30 : i32
    %95 = tpu.dynamic_rotate %32 by %c30_i32 dim 1 : vector<2x256xf32>, i32 -> vector<2x256xf32>
    %c12 = arith.constant 12 : index
    %c0_49 = arith.constant 0 : index
    %c0_50 = arith.constant 0 : index
    %96 = vector.load %arg4[%c12, %c0_49, %c0_50] : memref<49x2x256xf32, #tpu.memory_space<vmem>>, vector<1x2x256xf32>
    %97 = vector.shape_cast %96 : vector<1x2x256xf32> to vector<2x256xf32>
    %98 = arith.mulf %97, %95 : vector<2x256xf32>
    %99 = arith.addf %89, %98 : vector<2x256xf32>
    %c29_i32 = arith.constant 29 : i32
    %100 = tpu.dynamic_rotate %32 by %c29_i32 dim 1 : vector<2x256xf32>, i32 -> vector<2x256xf32>
    %c13 = arith.constant 13 : index
    %c0_51 = arith.constant 0 : index
    %c0_52 = arith.constant 0 : index
    %101 = vector.load %arg4[%c13, %c0_51, %c0_52] : memref<49x2x256xf32, #tpu.memory_space<vmem>>, vector<1x2x256xf32>
    %102 = vector.shape_cast %101 : vector<1x2x256xf32> to vector<2x256xf32>
    %103 = arith.mulf %102, %100 : vector<2x256xf32>
    %104 = arith.addf %94, %103 : vector<2x256xf32>
    %c19_i32 = arith.constant 19 : i32
    %105 = tpu.dynamic_rotate %32 by %c19_i32 dim 1 : vector<2x256xf32>, i32 -> vector<2x256xf32>
    %c14 = arith.constant 14 : index
    %c0_53 = arith.constant 0 : index
    %c0_54 = arith.constant 0 : index
    %106 = vector.load %arg4[%c14, %c0_53, %c0_54] : memref<49x2x256xf32, #tpu.memory_space<vmem>>, vector<1x2x256xf32>
    %107 = vector.shape_cast %106 : vector<1x2x256xf32> to vector<2x256xf32>
    %108 = arith.mulf %107, %105 : vector<2x256xf32>
    %109 = arith.addf %99, %108 : vector<2x256xf32>
    %c18_i32 = arith.constant 18 : i32
    %110 = tpu.dynamic_rotate %32 by %c18_i32 dim 1 : vector<2x256xf32>, i32 -> vector<2x256xf32>
    %c15 = arith.constant 15 : index
    %c0_55 = arith.constant 0 : index
    %c0_56 = arith.constant 0 : index
    %111 = vector.load %arg4[%c15, %c0_55, %c0_56] : memref<49x2x256xf32, #tpu.memory_space<vmem>>, vector<1x2x256xf32>
    %112 = vector.shape_cast %111 : vector<1x2x256xf32> to vector<2x256xf32>
    %113 = arith.mulf %112, %110 : vector<2x256xf32>
    %114 = arith.addf %104, %113 : vector<2x256xf32>
    %c17_i32 = arith.constant 17 : i32
    %115 = tpu.dynamic_rotate %32 by %c17_i32 dim 1 : vector<2x256xf32>, i32 -> vector<2x256xf32>
    %c16 = arith.constant 16 : index
    %c0_57 = arith.constant 0 : index
    %c0_58 = arith.constant 0 : index
    %116 = vector.load %arg4[%c16, %c0_57, %c0_58] : memref<49x2x256xf32, #tpu.memory_space<vmem>>, vector<1x2x256xf32>
    %117 = vector.shape_cast %116 : vector<1x2x256xf32> to vector<2x256xf32>
    %118 = arith.mulf %117, %115 : vector<2x256xf32>
    %119 = arith.addf %109, %118 : vector<2x256xf32>
    %c16_i32 = arith.constant 16 : i32
    %120 = tpu.dynamic_rotate %32 by %c16_i32 dim 1 : vector<2x256xf32>, i32 -> vector<2x256xf32>
    %c17 = arith.constant 17 : index
    %c0_59 = arith.constant 0 : index
    %c0_60 = arith.constant 0 : index
    %121 = vector.load %arg4[%c17, %c0_59, %c0_60] : memref<49x2x256xf32, #tpu.memory_space<vmem>>, vector<1x2x256xf32>
    %122 = vector.shape_cast %121 : vector<1x2x256xf32> to vector<2x256xf32>
    %123 = arith.mulf %122, %120 : vector<2x256xf32>
    %124 = arith.addf %114, %123 : vector<2x256xf32>
    %c15_i32 = arith.constant 15 : i32
    %125 = tpu.dynamic_rotate %32 by %c15_i32 dim 1 : vector<2x256xf32>, i32 -> vector<2x256xf32>
    %c18 = arith.constant 18 : index
    %c0_61 = arith.constant 0 : index
    %c0_62 = arith.constant 0 : index
    %126 = vector.load %arg4[%c18, %c0_61, %c0_62] : memref<49x2x256xf32, #tpu.memory_space<vmem>>, vector<1x2x256xf32>
    %127 = vector.shape_cast %126 : vector<1x2x256xf32> to vector<2x256xf32>
    %128 = arith.mulf %127, %125 : vector<2x256xf32>
    %129 = arith.addf %119, %128 : vector<2x256xf32>
    %c14_i32 = arith.constant 14 : i32
    %130 = tpu.dynamic_rotate %32 by %c14_i32 dim 1 : vector<2x256xf32>, i32 -> vector<2x256xf32>
    %c19 = arith.constant 19 : index
    %c0_63 = arith.constant 0 : index
    %c0_64 = arith.constant 0 : index
    %131 = vector.load %arg4[%c19, %c0_63, %c0_64] : memref<49x2x256xf32, #tpu.memory_space<vmem>>, vector<1x2x256xf32>
    %132 = vector.shape_cast %131 : vector<1x2x256xf32> to vector<2x256xf32>
    %133 = arith.mulf %132, %130 : vector<2x256xf32>
    %134 = arith.addf %124, %133 : vector<2x256xf32>
    %c13_i32 = arith.constant 13 : i32
    %135 = tpu.dynamic_rotate %32 by %c13_i32 dim 1 : vector<2x256xf32>, i32 -> vector<2x256xf32>
    %c20 = arith.constant 20 : index
    %c0_65 = arith.constant 0 : index
    %c0_66 = arith.constant 0 : index
    %136 = vector.load %arg4[%c20, %c0_65, %c0_66] : memref<49x2x256xf32, #tpu.memory_space<vmem>>, vector<1x2x256xf32>
    %137 = vector.shape_cast %136 : vector<1x2x256xf32> to vector<2x256xf32>
    %138 = arith.mulf %137, %135 : vector<2x256xf32>
    %139 = arith.addf %129, %138 : vector<2x256xf32>
    %c3_i32 = arith.constant 3 : i32
    %140 = tpu.dynamic_rotate %32 by %c3_i32 dim 1 : vector<2x256xf32>, i32 -> vector<2x256xf32>
    %c21 = arith.constant 21 : index
    %c0_67 = arith.constant 0 : index
    %c0_68 = arith.constant 0 : index
    %141 = vector.load %arg4[%c21, %c0_67, %c0_68] : memref<49x2x256xf32, #tpu.memory_space<vmem>>, vector<1x2x256xf32>
    %142 = vector.shape_cast %141 : vector<1x2x256xf32> to vector<2x256xf32>
    %143 = arith.mulf %142, %140 : vector<2x256xf32>
    %144 = arith.addf %134, %143 : vector<2x256xf32>
    %c2_i32 = arith.constant 2 : i32
    %145 = tpu.dynamic_rotate %32 by %c2_i32 dim 1 : vector<2x256xf32>, i32 -> vector<2x256xf32>
    %c22 = arith.constant 22 : index
    %c0_69 = arith.constant 0 : index
    %c0_70 = arith.constant 0 : index
    %146 = vector.load %arg4[%c22, %c0_69, %c0_70] : memref<49x2x256xf32, #tpu.memory_space<vmem>>, vector<1x2x256xf32>
    %147 = vector.shape_cast %146 : vector<1x2x256xf32> to vector<2x256xf32>
    %148 = arith.mulf %147, %145 : vector<2x256xf32>
    %149 = arith.addf %139, %148 : vector<2x256xf32>
    %c1_i32 = arith.constant 1 : i32
    %150 = tpu.dynamic_rotate %32 by %c1_i32 dim 1 : vector<2x256xf32>, i32 -> vector<2x256xf32>
    %c23 = arith.constant 23 : index
    %c0_71 = arith.constant 0 : index
    %c0_72 = arith.constant 0 : index
    %151 = vector.load %arg4[%c23, %c0_71, %c0_72] : memref<49x2x256xf32, #tpu.memory_space<vmem>>, vector<1x2x256xf32>
    %152 = vector.shape_cast %151 : vector<1x2x256xf32> to vector<2x256xf32>
    %153 = arith.mulf %152, %150 : vector<2x256xf32>
    %154 = arith.addf %144, %153 : vector<2x256xf32>
    %c24 = arith.constant 24 : index
    %c0_73 = arith.constant 0 : index
    %c0_74 = arith.constant 0 : index
    %155 = vector.load %arg4[%c24, %c0_73, %c0_74] : memref<49x2x256xf32, #tpu.memory_space<vmem>>, vector<1x2x256xf32>
    %156 = vector.shape_cast %155 : vector<1x2x256xf32> to vector<2x256xf32>
    %157 = arith.mulf %156, %32 : vector<2x256xf32>
    %158 = arith.addf %149, %157 : vector<2x256xf32>
    %c255_i32 = arith.constant 255 : i32
    %159 = tpu.dynamic_rotate %32 by %c255_i32 dim 1 : vector<2x256xf32>, i32 -> vector<2x256xf32>
    %c25 = arith.constant 25 : index
    %c0_75 = arith.constant 0 : index
    %c0_76 = arith.constant 0 : index
    %160 = vector.load %arg4[%c25, %c0_75, %c0_76] : memref<49x2x256xf32, #tpu.memory_space<vmem>>, vector<1x2x256xf32>
    %161 = vector.shape_cast %160 : vector<1x2x256xf32> to vector<2x256xf32>
    %162 = arith.mulf %161, %159 : vector<2x256xf32>
    %163 = arith.addf %154, %162 : vector<2x256xf32>
    %c254_i32 = arith.constant 254 : i32
    %164 = tpu.dynamic_rotate %32 by %c254_i32 dim 1 : vector<2x256xf32>, i32 -> vector<2x256xf32>
    %c26 = arith.constant 26 : index
    %c0_77 = arith.constant 0 : index
    %c0_78 = arith.constant 0 : index
    %165 = vector.load %arg4[%c26, %c0_77, %c0_78] : memref<49x2x256xf32, #tpu.memory_space<vmem>>, vector<1x2x256xf32>
    %166 = vector.shape_cast %165 : vector<1x2x256xf32> to vector<2x256xf32>
    %167 = arith.mulf %166, %164 : vector<2x256xf32>
    %168 = arith.addf %158, %167 : vector<2x256xf32>
    %c253_i32 = arith.constant 253 : i32
    %169 = tpu.dynamic_rotate %32 by %c253_i32 dim 1 : vector<2x256xf32>, i32 -> vector<2x256xf32>
    %c27 = arith.constant 27 : index
    %c0_79 = arith.constant 0 : index
    %c0_80 = arith.constant 0 : index
    %170 = vector.load %arg4[%c27, %c0_79, %c0_80] : memref<49x2x256xf32, #tpu.memory_space<vmem>>, vector<1x2x256xf32>
    %171 = vector.shape_cast %170 : vector<1x2x256xf32> to vector<2x256xf32>
    %172 = arith.mulf %171, %169 : vector<2x256xf32>
    %173 = arith.addf %163, %172 : vector<2x256xf32>
    %c243_i32 = arith.constant 243 : i32
    %174 = tpu.dynamic_rotate %32 by %c243_i32 dim 1 : vector<2x256xf32>, i32 -> vector<2x256xf32>
    %c28 = arith.constant 28 : index
    %c0_81 = arith.constant 0 : index
    %c0_82 = arith.constant 0 : index
    %175 = vector.load %arg4[%c28, %c0_81, %c0_82] : memref<49x2x256xf32, #tpu.memory_space<vmem>>, vector<1x2x256xf32>
    %176 = vector.shape_cast %175 : vector<1x2x256xf32> to vector<2x256xf32>
    %177 = arith.mulf %176, %174 : vector<2x256xf32>
    %178 = arith.addf %168, %177 : vector<2x256xf32>
    %c242_i32 = arith.constant 242 : i32
    %179 = tpu.dynamic_rotate %32 by %c242_i32 dim 1 : vector<2x256xf32>, i32 -> vector<2x256xf32>
    %c29 = arith.constant 29 : index
    %c0_83 = arith.constant 0 : index
    %c0_84 = arith.constant 0 : index
    %180 = vector.load %arg4[%c29, %c0_83, %c0_84] : memref<49x2x256xf32, #tpu.memory_space<vmem>>, vector<1x2x256xf32>
    %181 = vector.shape_cast %180 : vector<1x2x256xf32> to vector<2x256xf32>
    %182 = arith.mulf %181, %179 : vector<2x256xf32>
    %183 = arith.addf %173, %182 : vector<2x256xf32>
    %c241_i32 = arith.constant 241 : i32
    %184 = tpu.dynamic_rotate %32 by %c241_i32 dim 1 : vector<2x256xf32>, i32 -> vector<2x256xf32>
    %c30 = arith.constant 30 : index
    %c0_85 = arith.constant 0 : index
    %c0_86 = arith.constant 0 : index
    %185 = vector.load %arg4[%c30, %c0_85, %c0_86] : memref<49x2x256xf32, #tpu.memory_space<vmem>>, vector<1x2x256xf32>
    %186 = vector.shape_cast %185 : vector<1x2x256xf32> to vector<2x256xf32>
    %187 = arith.mulf %186, %184 : vector<2x256xf32>
    %188 = arith.addf %178, %187 : vector<2x256xf32>
    %c240_i32 = arith.constant 240 : i32
    %189 = tpu.dynamic_rotate %32 by %c240_i32 dim 1 : vector<2x256xf32>, i32 -> vector<2x256xf32>
    %c31 = arith.constant 31 : index
    %c0_87 = arith.constant 0 : index
    %c0_88 = arith.constant 0 : index
    %190 = vector.load %arg4[%c31, %c0_87, %c0_88] : memref<49x2x256xf32, #tpu.memory_space<vmem>>, vector<1x2x256xf32>
    %191 = vector.shape_cast %190 : vector<1x2x256xf32> to vector<2x256xf32>
    %192 = arith.mulf %191, %189 : vector<2x256xf32>
    %193 = arith.addf %183, %192 : vector<2x256xf32>
    %c239_i32 = arith.constant 239 : i32
    %194 = tpu.dynamic_rotate %32 by %c239_i32 dim 1 : vector<2x256xf32>, i32 -> vector<2x256xf32>
    %c32 = arith.constant 32 : index
    %c0_89 = arith.constant 0 : index
    %c0_90 = arith.constant 0 : index
    %195 = vector.load %arg4[%c32, %c0_89, %c0_90] : memref<49x2x256xf32, #tpu.memory_space<vmem>>, vector<1x2x256xf32>
    %196 = vector.shape_cast %195 : vector<1x2x256xf32> to vector<2x256xf32>
    %197 = arith.mulf %196, %194 : vector<2x256xf32>
    %198 = arith.addf %188, %197 : vector<2x256xf32>
    %c238_i32 = arith.constant 238 : i32
    %199 = tpu.dynamic_rotate %32 by %c238_i32 dim 1 : vector<2x256xf32>, i32 -> vector<2x256xf32>
    %c33 = arith.constant 33 : index
    %c0_91 = arith.constant 0 : index
    %c0_92 = arith.constant 0 : index
    %200 = vector.load %arg4[%c33, %c0_91, %c0_92] : memref<49x2x256xf32, #tpu.memory_space<vmem>>, vector<1x2x256xf32>
    %201 = vector.shape_cast %200 : vector<1x2x256xf32> to vector<2x256xf32>
    %202 = arith.mulf %201, %199 : vector<2x256xf32>
    %203 = arith.addf %193, %202 : vector<2x256xf32>
    %c237_i32 = arith.constant 237 : i32
    %204 = tpu.dynamic_rotate %32 by %c237_i32 dim 1 : vector<2x256xf32>, i32 -> vector<2x256xf32>
    %c34 = arith.constant 34 : index
    %c0_93 = arith.constant 0 : index
    %c0_94 = arith.constant 0 : index
    %205 = vector.load %arg4[%c34, %c0_93, %c0_94] : memref<49x2x256xf32, #tpu.memory_space<vmem>>, vector<1x2x256xf32>
    %206 = vector.shape_cast %205 : vector<1x2x256xf32> to vector<2x256xf32>
    %207 = arith.mulf %206, %204 : vector<2x256xf32>
    %208 = arith.addf %198, %207 : vector<2x256xf32>
    %c227_i32 = arith.constant 227 : i32
    %209 = tpu.dynamic_rotate %32 by %c227_i32 dim 1 : vector<2x256xf32>, i32 -> vector<2x256xf32>
    %c35 = arith.constant 35 : index
    %c0_95 = arith.constant 0 : index
    %c0_96 = arith.constant 0 : index
    %210 = vector.load %arg4[%c35, %c0_95, %c0_96] : memref<49x2x256xf32, #tpu.memory_space<vmem>>, vector<1x2x256xf32>
    %211 = vector.shape_cast %210 : vector<1x2x256xf32> to vector<2x256xf32>
    %212 = arith.mulf %211, %209 : vector<2x256xf32>
    %213 = arith.addf %203, %212 : vector<2x256xf32>
    %c226_i32 = arith.constant 226 : i32
    %214 = tpu.dynamic_rotate %32 by %c226_i32 dim 1 : vector<2x256xf32>, i32 -> vector<2x256xf32>
    %c36 = arith.constant 36 : index
    %c0_97 = arith.constant 0 : index
    %c0_98 = arith.constant 0 : index
    %215 = vector.load %arg4[%c36, %c0_97, %c0_98] : memref<49x2x256xf32, #tpu.memory_space<vmem>>, vector<1x2x256xf32>
    %216 = vector.shape_cast %215 : vector<1x2x256xf32> to vector<2x256xf32>
    %217 = arith.mulf %216, %214 : vector<2x256xf32>
    %218 = arith.addf %208, %217 : vector<2x256xf32>
    %c225_i32 = arith.constant 225 : i32
    %219 = tpu.dynamic_rotate %32 by %c225_i32 dim 1 : vector<2x256xf32>, i32 -> vector<2x256xf32>
    %c37 = arith.constant 37 : index
    %c0_99 = arith.constant 0 : index
    %c0_100 = arith.constant 0 : index
    %220 = vector.load %arg4[%c37, %c0_99, %c0_100] : memref<49x2x256xf32, #tpu.memory_space<vmem>>, vector<1x2x256xf32>
    %221 = vector.shape_cast %220 : vector<1x2x256xf32> to vector<2x256xf32>
    %222 = arith.mulf %221, %219 : vector<2x256xf32>
    %223 = arith.addf %213, %222 : vector<2x256xf32>
    %c224_i32 = arith.constant 224 : i32
    %224 = tpu.dynamic_rotate %32 by %c224_i32 dim 1 : vector<2x256xf32>, i32 -> vector<2x256xf32>
    %c38 = arith.constant 38 : index
    %c0_101 = arith.constant 0 : index
    %c0_102 = arith.constant 0 : index
    %225 = vector.load %arg4[%c38, %c0_101, %c0_102] : memref<49x2x256xf32, #tpu.memory_space<vmem>>, vector<1x2x256xf32>
    %226 = vector.shape_cast %225 : vector<1x2x256xf32> to vector<2x256xf32>
    %227 = arith.mulf %226, %224 : vector<2x256xf32>
    %228 = arith.addf %218, %227 : vector<2x256xf32>
    %c223_i32 = arith.constant 223 : i32
    %229 = tpu.dynamic_rotate %32 by %c223_i32 dim 1 : vector<2x256xf32>, i32 -> vector<2x256xf32>
    %c39 = arith.constant 39 : index
    %c0_103 = arith.constant 0 : index
    %c0_104 = arith.constant 0 : index
    %230 = vector.load %arg4[%c39, %c0_103, %c0_104] : memref<49x2x256xf32, #tpu.memory_space<vmem>>, vector<1x2x256xf32>
    %231 = vector.shape_cast %230 : vector<1x2x256xf32> to vector<2x256xf32>
    %232 = arith.mulf %231, %229 : vector<2x256xf32>
    %233 = arith.addf %223, %232 : vector<2x256xf32>
    %c222_i32 = arith.constant 222 : i32
    %234 = tpu.dynamic_rotate %32 by %c222_i32 dim 1 : vector<2x256xf32>, i32 -> vector<2x256xf32>
    %c40 = arith.constant 40 : index
    %c0_105 = arith.constant 0 : index
    %c0_106 = arith.constant 0 : index
    %235 = vector.load %arg4[%c40, %c0_105, %c0_106] : memref<49x2x256xf32, #tpu.memory_space<vmem>>, vector<1x2x256xf32>
    %236 = vector.shape_cast %235 : vector<1x2x256xf32> to vector<2x256xf32>
    %237 = arith.mulf %236, %234 : vector<2x256xf32>
    %238 = arith.addf %228, %237 : vector<2x256xf32>
    %c221_i32 = arith.constant 221 : i32
    %239 = tpu.dynamic_rotate %32 by %c221_i32 dim 1 : vector<2x256xf32>, i32 -> vector<2x256xf32>
    %c41 = arith.constant 41 : index
    %c0_107 = arith.constant 0 : index
    %c0_108 = arith.constant 0 : index
    %240 = vector.load %arg4[%c41, %c0_107, %c0_108] : memref<49x2x256xf32, #tpu.memory_space<vmem>>, vector<1x2x256xf32>
    %241 = vector.shape_cast %240 : vector<1x2x256xf32> to vector<2x256xf32>
    %242 = arith.mulf %241, %239 : vector<2x256xf32>
    %243 = arith.addf %233, %242 : vector<2x256xf32>
    %c211_i32 = arith.constant 211 : i32
    %244 = tpu.dynamic_rotate %32 by %c211_i32 dim 1 : vector<2x256xf32>, i32 -> vector<2x256xf32>
    %c42 = arith.constant 42 : index
    %c0_109 = arith.constant 0 : index
    %c0_110 = arith.constant 0 : index
    %245 = vector.load %arg4[%c42, %c0_109, %c0_110] : memref<49x2x256xf32, #tpu.memory_space<vmem>>, vector<1x2x256xf32>
    %246 = vector.shape_cast %245 : vector<1x2x256xf32> to vector<2x256xf32>
    %247 = arith.mulf %246, %244 : vector<2x256xf32>
    %248 = arith.addf %238, %247 : vector<2x256xf32>
    %c210_i32 = arith.constant 210 : i32
    %249 = tpu.dynamic_rotate %32 by %c210_i32 dim 1 : vector<2x256xf32>, i32 -> vector<2x256xf32>
    %c43 = arith.constant 43 : index
    %c0_111 = arith.constant 0 : index
    %c0_112 = arith.constant 0 : index
    %250 = vector.load %arg4[%c43, %c0_111, %c0_112] : memref<49x2x256xf32, #tpu.memory_space<vmem>>, vector<1x2x256xf32>
    %251 = vector.shape_cast %250 : vector<1x2x256xf32> to vector<2x256xf32>
    %252 = arith.mulf %251, %249 : vector<2x256xf32>
    %253 = arith.addf %243, %252 : vector<2x256xf32>
    %c209_i32 = arith.constant 209 : i32
    %254 = tpu.dynamic_rotate %32 by %c209_i32 dim 1 : vector<2x256xf32>, i32 -> vector<2x256xf32>
    %c44 = arith.constant 44 : index
    %c0_113 = arith.constant 0 : index
    %c0_114 = arith.constant 0 : index
    %255 = vector.load %arg4[%c44, %c0_113, %c0_114] : memref<49x2x256xf32, #tpu.memory_space<vmem>>, vector<1x2x256xf32>
    %256 = vector.shape_cast %255 : vector<1x2x256xf32> to vector<2x256xf32>
    %257 = arith.mulf %256, %254 : vector<2x256xf32>
    %258 = arith.addf %248, %257 : vector<2x256xf32>
    %c208_i32 = arith.constant 208 : i32
    %259 = tpu.dynamic_rotate %32 by %c208_i32 dim 1 : vector<2x256xf32>, i32 -> vector<2x256xf32>
    %c45 = arith.constant 45 : index
    %c0_115 = arith.constant 0 : index
    %c0_116 = arith.constant 0 : index
    %260 = vector.load %arg4[%c45, %c0_115, %c0_116] : memref<49x2x256xf32, #tpu.memory_space<vmem>>, vector<1x2x256xf32>
    %261 = vector.shape_cast %260 : vector<1x2x256xf32> to vector<2x256xf32>
    %262 = arith.mulf %261, %259 : vector<2x256xf32>
    %263 = arith.addf %253, %262 : vector<2x256xf32>
    %c207_i32 = arith.constant 207 : i32
    %264 = tpu.dynamic_rotate %32 by %c207_i32 dim 1 : vector<2x256xf32>, i32 -> vector<2x256xf32>
    %c46 = arith.constant 46 : index
    %c0_117 = arith.constant 0 : index
    %c0_118 = arith.constant 0 : index
    %265 = vector.load %arg4[%c46, %c0_117, %c0_118] : memref<49x2x256xf32, #tpu.memory_space<vmem>>, vector<1x2x256xf32>
    %266 = vector.shape_cast %265 : vector<1x2x256xf32> to vector<2x256xf32>
    %267 = arith.mulf %266, %264 : vector<2x256xf32>
    %268 = arith.addf %258, %267 : vector<2x256xf32>
    %c206_i32 = arith.constant 206 : i32
    %269 = tpu.dynamic_rotate %32 by %c206_i32 dim 1 : vector<2x256xf32>, i32 -> vector<2x256xf32>
    %c47 = arith.constant 47 : index
    %c0_119 = arith.constant 0 : index
    %c0_120 = arith.constant 0 : index
    %270 = vector.load %arg4[%c47, %c0_119, %c0_120] : memref<49x2x256xf32, #tpu.memory_space<vmem>>, vector<1x2x256xf32>
    %271 = vector.shape_cast %270 : vector<1x2x256xf32> to vector<2x256xf32>
    %272 = arith.mulf %271, %269 : vector<2x256xf32>
    %273 = arith.addf %263, %272 : vector<2x256xf32>
    %c205_i32 = arith.constant 205 : i32
    %274 = tpu.dynamic_rotate %32 by %c205_i32 dim 1 : vector<2x256xf32>, i32 -> vector<2x256xf32>
    %c48 = arith.constant 48 : index
    %c0_121 = arith.constant 0 : index
    %c0_122 = arith.constant 0 : index
    %275 = vector.load %arg4[%c48, %c0_121, %c0_122] : memref<49x2x256xf32, #tpu.memory_space<vmem>>, vector<1x2x256xf32>
    %276 = vector.shape_cast %275 : vector<1x2x256xf32> to vector<2x256xf32>
    %277 = arith.mulf %276, %274 : vector<2x256xf32>
    %278 = arith.addf %268, %277 : vector<2x256xf32>
    %279 = arith.addf %278, %273 : vector<2x256xf32>
    %280 = vector.extract_strided_slice %279 {offsets = [0, 0], sizes = [1, 256], strides = [1, 1]} : vector<2x256xf32> to vector<1x256xf32>
    %281 = vector.extract_strided_slice %279 {offsets = [1, 0], sizes = [1, 256], strides = [1, 1]} : vector<2x256xf32> to vector<1x256xf32>
    %282 = arith.addf %280, %281 : vector<1x256xf32>
    %cst_123 = arith.constant 0.000000e+00 : f32
    %283 = vector.broadcast %cst_123 : f32 to vector<1x256xf32>
    %284 = arith.subf %283, %282 : vector<1x256xf32>
    %285 = math.exp %284 : vector<1x256xf32>
    %cst_124 = arith.constant 1.000000e+00 : f32
    %286 = vector.broadcast %cst_124 : f32 to vector<1x256xf32>
    %287 = arith.addf %286, %285 : vector<1x256xf32>
    %288 = tpu.reciprocal %287 {approx = true} : vector<1x256xf32> -> vector<1x256xf32>
    %c0_125 = arith.constant 0 : index
    %c0_126 = arith.constant 0 : index
    %c0_127 = arith.constant 0 : index
    %289 = vector.load %arg5[%c0_125, %c0_126, %c0_127] : memref<1x4x256xf32, #tpu.memory_space<vmem>>, vector<1x4x256xf32>
    %290 = vector.shape_cast %288 : vector<1x256xf32> to vector<1x1x256xf32>
    %291 = vector.broadcast %290 : vector<1x1x256xf32> to vector<1x4x256xf32>
    %292 = arith.mulf %289, %291 : vector<1x4x256xf32>
    %c0_128 = arith.constant 0 : index
    %c0_129 = arith.constant 0 : index
    %c0_130 = arith.constant 0 : index
    %293 = vector.load %arg5[%c0_128, %c0_129, %c0_130] : memref<1x4x256xf32, #tpu.memory_space<vmem>>, vector<1x4x256xf32>
    tpu.vector_store %arg5[%c0_128, %c0_129, %c0_130], %292 {strides = array<i32>} : memref<1x4x256xf32, #tpu.memory_space<vmem>>, vector<1x4x256xf32>,
    return
  }
  func.func @transform_0(%arg0: i32) -> (i32, i32, i32) {
    %c0_i32 = arith.constant 0 : i32
    %c0_i32_0 = arith.constant 0 : i32
    %c0_i32_1 = arith.constant 0 : i32
    return %arg0, %c0_i32, %c0_i32_0 : i32, i32, i32
  }
  func.func @transform_1(%arg0: i32) -> (i32, i32) {
    %c0_i32 = arith.constant 0 : i32
    %c0_i32_0 = arith.constant 0 : i32
    %c0_i32_1 = arith.constant 0 : i32
    return %c0_i32, %c0_i32_0 : i32, i32
  }
  func.func @transform_2(%arg0: i32) -> (i32, i32) {
    %c0_i32 = arith.constant 0 : i32
    %c0_i32_0 = arith.constant 0 : i32
    %c0_i32_1 = arith.constant 0 : i32
    return %c0_i32, %c0_i32_0 : i32, i32
  }
  func.func @transform_3(%arg0: i32) -> (i32, i32, i32) {
    %c0_i32 = arith.constant 0 : i32
    %c0_i32_0 = arith.constant 0 : i32
    %c0_i32_1 = arith.constant 0 : i32
    %c0_i32_2 = arith.constant 0 : i32
    return %c0_i32, %c0_i32_0, %c0_i32_1 : i32, i32, i32
  }
  func.func @transform_4(%arg0: i32) -> (i32, i32, i32) {
    %c0_i32 = arith.constant 0 : i32
    %c0_i32_0 = arith.constant 0 : i32
    %c0_i32_1 = arith.constant 0 : i32
    return %arg0, %c0_i32, %c0_i32_0 : i32, i32, i32
  }
}

</mosaic_0001>

<llo_original>
// kernel: tpu_custom_call.1
$region0: #{tpu_custom_call.1}
  #allocation0 [shape = 'u32[]', space=smem, size = 0x4, offset = 0x4, fixed_abs, tag = 'smem constant byte address 0x4 - core index']
  #allocation1 [shape = 'u32[144,128]{1,0:T(1,128)}', space=vmem, size = 0x12000, scoped, tag = 'internal scratch']
  %s0 = inlined_call_operand.hbm [shape: f32[2,4,256], index: 0, kind: input, shape index: {}]
  %s1 = inlined_call_operand.hbm [shape: f32[4,4], index: 1, kind: input, shape index: {}]
  %s2 = inlined_call_operand.vmem [shape: f32[1,4], index: 2, kind: input, shape index: {}]
  %s3 = inlined_call_operand.hbm [shape: f32[49,2,256], index: 3, kind: input, shape index: {}]
  %s4 = inlined_call_operand.hbm [shape: f32[2,4,256], index: 4, kind: output, shape index: {}]
  %s5 = sld [smem:[#allocation0]]
  $region61: #{tpu_custom_call.1} parent=0
    _
  %s7 = ssub.s32 1, %s5
  %s8 = scalar_select 0, %s7, %s5
  $region1: #{tpu_custom_call.1} parent=0
    #allocation2 [shape = 'u8[8192]{0}', space=vmem, size = 0x2000, scoped, tag = 'input window, operand 0']
    #allocation3 [shape = 's32[2]{0}', space=sflag, size = 0x8, scoped, tag = 'scoped memory for tpu_custom_call.1']
    #allocation4 [shape = 's32[2]{0}', space=sflag, size = 0x8, scoped, tag = 'scoped memory for tpu_custom_call.1']
    #allocation5 [shape = 'u8[2048]{0}', space=vmem, size = 0x800, scoped, tag = 'input window, operand 1, single buffered']
    #allocation6 [shape = 's32[1]{0}', space=sflag, size = 0x4, scoped, tag = 'scoped memory for tpu_custom_call.1']
    #allocation7 [shape = 'u8[100352]{0}', space=vmem, size = 0x18800, scoped, tag = 'input window, operand 3, single buffered']
    #allocation8 [shape = 'u8[8192]{0}', space=vmem, size = 0x2000, scoped, tag = 'output window, operand 0']
    %9 = vsyncpa [#allocation3], 0
    %s10 = scalar_lea.sflag [#allocation3], 1
    %11 = vsyncpa %s10, 0
    %12 = vsyncpa [#allocation6], 0
    %13 = vsyncpa [#allocation4], 0
    %s14 = scalar_lea.sflag [#allocation4], 1
    %15 = vsyncpa %s14, 0
    loop: start=0, step=1, limit=4
    $region2: #{tpu_custom_call.1} parent=1 // loop_pre_header
      _
    $region3: #{tpu_custom_call.1} parent=1 // loop_header
      %s17 = sphi 0, %s21
      %p18 = scmp.ge.s32.totalorder %s17, 4
      %s27 = sphi 0, %s29
      %s30 = sphi 0, %s27
      %s31 = sphi 0, %s30
      %s47 = sphi 0, %s31
      %s51 = sphi 0, %s51
      %s53 = sphi 0, %s51
      %s54 = sphi 0, %s53
      %s68 = sphi 0, %s54
      %s72 = sphi 0, %s72
      %s74 = sphi 0, %s72
      %s75 = sphi 0, %s74
      %s89 = sphi 0, %s75
      %s93 = sphi 0, %s93
      %s95 = sphi 0, %s93
      %s96 = sphi 0, %s95
      %s110 = sphi 0, %s96
      %s116 = sphi 0, %s118
      %s119 = sphi 0, %s116
      %s120 = sphi 0, %s119
      %s136 = sphi 0, %s120
    $region4: #{tpu_custom_call.1} parent=1 // loop_header_branch
      %20 = sbr.rel (%p18) target = $region8
    $region5: #{tpu_custom_call.1} parent=1 // loop_body
      %s22 = ssub.s32 %s17, 1
      %s23 = ssub.s32 %s17, 2
      %s24 = sadd.s32 %s17, 1
      %s25 = ssub.s32 %s17, %s24
      %p26 = scmp.eq.s32.totalorder %s25, 0
      %s28 = sadd.s32 %s27, 1
      %s29 = scalar_select %p26, %s27, %s28
      %p32 = pneg %p26
      %p33 = scmp.eq.s32.totalorder %s17, 1
      %p34 = por %p32, %p33
      %p35 = scmp.ne.s32.totalorder %s27, %s30
      %p36 = scmp.eq.s32.totalorder %s17, 0
      %p37 = por %p35, %p36
      %p38 = scmp.ne.s32.totalorder %s27, %s30
      %p39 = scmp.eq.s32.totalorder %s22, 1
      %p40 = por %p38, %p39
      %p41 = scmp.ne.s32.totalorder %s30, %s31
      %p42 = scmp.eq.s32.totalorder %s22, 0
      %p43 = por %p41, %p42
      %p44 = scmp.ne.s32.totalorder %s30, %s31
      %p45 = scmp.eq.s32.totalorder %s23, 1
      %p46 = por %p44, %p45
      %p48 = scmp.ne.s32.totalorder %s31, %s47
      %p49 = scmp.eq.s32.totalorder %s23, 0
      %p50 = por %p48, %p49
      %s52 = sadd.s32 %s51, 1
      %p55 = scmp.eq.s32.totalorder %s17, 1
      %p56 = scmp.ne.s32.totalorder %s51, %s53
      %p57 = scmp.eq.s32.totalorder %s17, 0
      %p58 = por %p56, %p57
      %p59 = scmp.ne.s32.totalorder %s51, %s53
      %p60 = scmp.eq.s32.totalorder %s22, 1
      %p61 = por %p59, %p60
      %p62 = scmp.ne.s32.totalorder %s53, %s54
      %p63 = scmp.eq.s32.totalorder %s22, 0
      %p64 = por %p62, %p63
      %p65 = scmp.ne.s32.totalorder %s53, %s54
      %p66 = scmp.eq.s32.totalorder %s23, 1
      %p67 = por %p65, %p66
      %p69 = scmp.ne.s32.totalorder %s54, %s68
      %p70 = scmp.eq.s32.totalorder %s23, 0
      %p71 = por %p69, %p70
      %s73 = sadd.s32 %s72, 1
      %p76 = scmp.eq.s32.totalorder %s17, 1
      %p77 = scmp.ne.s32.totalorder %s72, %s74
      %p78 = scmp.eq.s32.totalorder %s17, 0
      %p79 = por %p77, %p78
      %p80 = scmp.ne.s32.totalorder %s72, %s74
      %p81 = scmp.eq.s32.totalorder %s22, 1
      %p82 = por %p80, %p81
      %p83 = scmp.ne.s32.totalorder %s74, %s75
      %p84 = scmp.eq.s32.totalorder %s22, 0
      %p85 = por %p83, %p84
      %p86 = scmp.ne.s32.totalorder %s74, %s75
      %p87 = scmp.eq.s32.totalorder %s23, 1
      %p88 = por %p86, %p87
      %p90 = scmp.ne.s32.totalorder %s75, %s89
      %p91 = scmp.eq.s32.totalorder %s23, 0
      %p92 = por %p90, %p91
      %s94 = sadd.s32 %s93, 1
      %p97 = scmp.eq.s32.totalorder %s17, 1
      %p98 = scmp.ne.s32.totalorder %s93, %s95
      %p99 = scmp.eq.s32.totalorder %s17, 0
      %p100 = por %p98, %p99
      %p101 = scmp.ne.s32.totalorder %s93, %s95
      %p102 = scmp.eq.s32.totalorder %s22, 1
      %p103 = por %p101, %p102
      %p104 = scmp.ne.s32.totalorder %s95, %s96
      %p105 = scmp.eq.s32.totalorder %s22, 0
      %p106 = por %p104, %p105
      %p107 = scmp.ne.s32.totalorder %s95, %s96
      %p108 = scmp.eq.s32.totalorder %s23, 1
      %p109 = por %p107, %p108
      %p111 = scmp.ne.s32.totalorder %s96, %s110
      %p112 = scmp.eq.s32.totalorder %s23, 0
      %p113 = por %p111, %p112
      %s114 = ssub.s32 %s17, %s24
      %p115 = scmp.eq.s32.totalorder %s114, 0
      %s117 = sadd.s32 %s116, 1
      %s118 = scalar_select %p115, %s116, %s117
      %p121 = pneg %p115
      %p122 = scmp.eq.s32.totalorder %s17, 1
      %p123 = por %p121, %p122
      %p124 = scmp.ne.s32.totalorder %s116, %s119
      %p125 = scmp.eq.s32.totalorder %s17, 0
      %p126 = por %p124, %p125
      %p127 = scmp.ne.s32.totalorder %s116, %s119
      %p128 = scmp.eq.s32.totalorder %s22, 1
      %p129 = por %p127, %p128
      %p130 = scmp.ne.s32.totalorder %s119, %s120
      %p131 = scmp.eq.s32.totalorder %s22, 0
      %p132 = por %p130, %p131
      %p133 = scmp.ne.s32.totalorder %s119, %s120
      %p134 = scmp.eq.s32.totalorder %s23, 1
      %p135 = por %p133, %p134
      %p137 = scmp.ne.s32.totalorder %s120, %s136
      %p138 = scmp.eq.s32.totalorder %s23, 0
      %p139 = por %p137, %p138
      %p140 = scmp.le.s32.totalorder 1, %s17
      %p141 = scmp.lt.s32.totalorder %s17, 3
      %p142 = pnand %p140, %p141
      %p143 = pneg %p142
      // Predicated region
      $region9: #{tpu_custom_call.1} parent=5 // pred_check
        _
      $region10: #{tpu_custom_call.1} parent=5 // pred_check_branch
        %145 = sbr.rel (%p142) target = $region12
      $region11: #{tpu_custom_call.1} parent=5 // pred_region
        %s146 = ssub.s32 %s17, 1
        // Predicated region
        $region13: #{tpu_custom_call.1} parent=11 // pred_check
          %p147 = pneg %p64
        $region14: #{tpu_custom_call.1} parent=11 // pred_check_branch
          %149 = sbr.rel (%p147) target = $region16
        $region15: #{tpu_custom_call.1} parent=11 // pred_region
          %s151 = ssub.s32 64, 64
          %152 = vsyncadd [#allocation6], %s151
          %s154 = sshll.u32 [#allocation5], 4
          %s155 = int_to_ptr.vmem [resolvable:$true] %s154
          %157 = dma.hbm_to_vmem [thread:$0]  %s1, 64, %s155, [#allocation6]
        $region16: #{tpu_custom_call.1} parent=11 // pred_fallthru
          _
        // Predicated region
        $region17: #{tpu_custom_call.1} parent=11 // pred_check
          %p158 = pneg %p85
        $region18: #{tpu_custom_call.1} parent=11 // pred_check_branch
          %160 = sbr.rel (%p158) target = $region20
        $region19: #{tpu_custom_call.1} parent=11 // pred_region
          _
        $region20: #{tpu_custom_call.1} parent=11 // pred_fallthru
          _
        // Predicated region
        $region21: #{tpu_custom_call.1} parent=11 // pred_check
          %p161 = pneg %p106
        $region22: #{tpu_custom_call.1} parent=11 // pred_check_branch
          %163 = sbr.rel (%p161) target = $region24
        $region23: #{tpu_custom_call.1} parent=11 // pred_region
          %s165 = ssub.s32 3136, 3136
          %166 = vsyncadd [#allocation6], %s165
          %s167 = sshll.u32 [#allocation7], 4
          %s168 = int_to_ptr.vmem [resolvable:$true] %s167
          %173 = dma.hbm_to_vmem [thread:$0]  %s3, 3136, %s168, [#allocation6], 64, 64, 4
        $region24: #{tpu_custom_call.1} parent=11 // pred_fallthru
          _
      $region12: #{tpu_custom_call.1} parent=5 // pred_fallthru
        _
      %p174 = scmp.lt.s32.totalorder %s17, 2
      // Predicated region
      $region25: #{tpu_custom_call.1} parent=5 // pred_check
        %p175 = pneg %p174
      $region26: #{tpu_custom_call.1} parent=5 // pred_check_branch
        %177 = sbr.rel (%p175) target = $region28
      $region27: #{tpu_custom_call.1} parent=5 // pred_region
        // Predicated region
        $region29: #{tpu_custom_call.1} parent=27 // pred_check
          %p178 = pneg %p37
        $region30: #{tpu_custom_call.1} parent=27 // pred_check_branch
          %180 = sbr.rel (%p178) target = $region32
        $region31: #{tpu_custom_call.1} parent=27 // pred_region
          %s181 = sand.u32 %s27, 1
          %s182 = scalar_lea.sflag [#allocation3], %s181
          %s183 = sand.u32 %s27, 1
          %s184 = smul.addr %s183, 8
          %s185 = scalar_lea.vmem [#allocation2], %s184
          %s187 = ssub.s32 128, 128
          %188 = vsyncadd %s182, %s187
          %s189 = smul.addr %s17, 2
          %s190 = smul.addr %s189, 64
          %s191 = scalar_lea.hbm %s0, %s190
          %s193 = sshll.u32 %s185, 4
          %s194 = int_to_ptr.vmem [resolvable:$true] %s193
          %196 = dma.hbm_to_vmem [thread:$0]  %s191, 128, %s194, %s182
        $region32: #{tpu_custom_call.1} parent=27 // pred_fallthru
          _
      $region28: #{tpu_custom_call.1} parent=5 // pred_fallthru
        _
      %p197 = scmp.le.s32.totalorder 1, %s17
      %p198 = scmp.lt.s32.totalorder %s17, 3
      %p199 = pnand %p197, %p198
      %p200 = pneg %p199
      // Predicated region
      $region33: #{tpu_custom_call.1} parent=5 // pred_check
        _
      $region34: #{tpu_custom_call.1} parent=5 // pred_check_branch
        %202 = sbr.rel (%p199) target = $region36
      $region35: #{tpu_custom_call.1} parent=5 // pred_region
        %s203 = ssub.s32 %s17, 1
        %s204 = sand.u32 %s30, 1
        %s205 = scalar_lea.sflag [#allocation3], %s204
        %s206 = sand.u32 %s30, 1
        %s207 = smul.addr %s206, 8
        %s208 = scalar_lea.vmem [#allocation2], %s207
        // Predicated region
        $region37: #{tpu_custom_call.1} parent=35 // pred_check
          %p209 = pneg %p43
        $region38: #{tpu_custom_call.1} parent=35 // pred_check_branch
          %211 = sbr.rel (%p209) target = $region40
        $region39: #{tpu_custom_call.1} parent=35 // pred_region
          %212 = dma.done %s205, 128
        $region40: #{tpu_custom_call.1} parent=35 // pred_fallthru
          _
        // Predicated region
        $region41: #{tpu_custom_call.1} parent=35 // pred_check
          %p213 = pneg %p64
        $region42: #{tpu_custom_call.1} parent=35 // pred_check_branch
          %215 = sbr.rel (%p213) target = $region44
        $region43: #{tpu_custom_call.1} parent=35 // pred_region
          %216 = dma.done [#allocation6], 64
        $region44: #{tpu_custom_call.1} parent=35 // pred_fallthru
          _
        // Predicated region
        $region45: #{tpu_custom_call.1} parent=35 // pred_check
          %p217 = pneg %p106
        $region46: #{tpu_custom_call.1} parent=35 // pred_check_branch
          %219 = sbr.rel (%p217) target = $region48
        $region47: #{tpu_custom_call.1} parent=35 // pred_region
          %220 = dma.done [#allocation6], 3136
        $region48: #{tpu_custom_call.1} parent=35 // pred_fallthru
          _
        %s221 = sand.u32 %s30, 1
        %s222 = scalar_lea.sflag [#allocation3], %s221
        %s223 = sand.u32 %s30, 1
        %s224 = smul.addr %s223, 8
        %s225 = scalar_lea.vmem [#allocation2], %s224
        %p226 = pneg %p43
        %p227 = pneg %p40
        %p228 = pneg %p64
        %p229 = pneg %p61
        %p230 = pneg %p85
        %p231 = pneg %p82
        %p232 = pneg %p106
        %p233 = pneg %p103
        %p234 = pneg %p132
        %p235 = pneg %p129
        %s236 = sand.u32 %s119, 1
        %s237 = scalar_lea.sflag [#allocation4], %s236
        %s238 = sand.u32 %s119, 1
        %s239 = smul.addr %s238, 8
        %s240 = scalar_lea.vmem [#allocation8], %s239
        %v241 = vld [vmem:[%s208] sm:$0xff]
        %v243 = vcombine.high %v241, %v241
        %vm245 = vcmask 1043456
        %v246 = vsel %vm245, %v241, 0.0
        %v247 = vsel %vm245, %v243, 0.0
        %v248 = vadd.f32 %v246, %v247
        %249 = vadd.xlane.f32.xlu0 %v248
        %v250 = vpop.xlane.xlu0 %249
        %v251 = vmul.f32 %v250, 0.00390625
        %v252 = vld [vmem:[%s2] sm:$0x1]
        %v253 = vld [vmem:[#allocation5] sm:$0xf]
        %v255 = vlaneseq
        %v256 = vshrl.u32 %v255, 7
        %v257 = vsub.s32 0, %v256
        %v258 = vrot.slane %v253, %v257
        %260 = vbcast.lane.b32.xlu0 %v258, 256
        %v261 = vpop.permute.xlu0 %260
        %v262 = vlaneseq
        %v263 = vshrl.u32 %v262, 7
        %v264 = vsub.s32 1, %v263
        %v265 = vrot.slane %v253, %v264
        %267 = vbcast.lane.b32.xlu0 %v265, 256
        %v268 = vpop.permute.xlu0 %267
        %v269 = vlaneseq
        %v270 = vshrl.u32 %v269, 7
        %v271 = vsub.s32 2, %v270
        %v272 = vrot.slane %v253, %v271
        %274 = vbcast.lane.b32.xlu0 %v272, 256
        %v275 = vpop.permute.xlu0 %274
        %v276 = vlaneseq
        %v277 = vshrl.u32 %v276, 7
        %v278 = vsub.s32 3, %v277
        %v279 = vrot.slane %v253, %v278
        %281 = vbcast.lane.b32.xlu0 %v279, 256
        %v282 = vpop.permute.xlu0 %281
        %v287 = vmul.f32 %v251, %v261
        %v288 = vmul.f32 %v251, %v268
        %v289 = vmul.f32 %v251, %v275
        %v290 = vmul.f32 %v251, %v282
        %295 = vset.pattern.permute.xlu0 0
        %296 = vperm.xlu0 %295, %v287
        %v297 = vpop.permute.xlu0 %296
        %298 = vset.pattern.permute.xlu0 0
        %299 = vperm.xlu0 %298, %v288
        %v300 = vpop.permute.xlu0 %299
        %301 = vset.pattern.permute.xlu0 0
        %302 = vperm.xlu0 %301, %v289
        %v303 = vpop.permute.xlu0 %302
        %304 = vset.pattern.permute.xlu0 0
        %305 = vperm.xlu0 %304, %v290
        %v306 = vpop.permute.xlu0 %305
        %v307 = vlaneseq
        %v308 = vand.u32 %v307, 127
        %v309 = vlaneseq
        %v310 = vshrl.u32 %v309, 7
        %v311 = vsub.s32 %v308, %v310
        %v312 = vrot.slane %v297, %v311
        %v313 = vlaneseq
        %v314 = vshrl.u32 %v313, 7
        %v315 = vsub.s32 %v308, %v314
        %v316 = vrot.slane %v300, %v315
        %v317 = vlaneseq
        %v318 = vshrl.u32 %v317, 7
        %v319 = vsub.s32 %v308, %v318
        %v320 = vrot.slane %v303, %v319
        %v321 = vlaneseq
        %v322 = vshrl.u32 %v321, 7
        %v323 = vsub.s32 %v308, %v322
        %v324 = vrot.slane %v306, %v323
        %vm325 = vcmask 1041409
        %v326 = vsel %vm325, %v316, %v312
        %vm327 = vcmask 1042434
        %v328 = vsel %vm327, %v320, %v326
        %vm329 = vcmask 1043459
        %v330 = vsel %vm329, %v324, %v328
        %vm332 = vcmask 27648
        %v333 = vsel %vm332, %v330, 0.0
        %334 = vadd.xlane.f32.xlu0 %v333
        %v335 = vpop.xlane.xlu0 %334
        %v337 = vlaneseq
        %v338 = vshrl.u32 %v337, 7
        %v339 = vsub.s32 0, %v338
        %v340 = vrot.slane %v252, %v339
        %342 = vbcast.lane.b32.xlu0 %v340, 256
        %v343 = vpop.permute.xlu0 %342
        %v345 = vadd.f32 %v335, %v343
        %v346 = vsub.f32 0.0, %v345
        %v347 = vmul.f32 %v346, 1.442695
        %v348 = vpow.pop %v347
        %v349 = vadd.f32 %v348, 1.0
        %v350 = vrcp.pop %v349
        %v351 = vmul.f32 1.0, %v350
        %353 = vset.pattern.permute.xlu0 0
        %354 = vperm.xlu0 %353, %v351
        %v355 = vpop.permute.xlu0 %354
        %v357 = vunpack.c.l.s4 839922192
        %v358 = vunpack.c.0.s8 %v357
        %v359 = vlaneseq
        %v360 = vshrl.u32 %v359, 7
        %v361 = vsub.s32 %v358, %v360
        %v362 = vrot.slane %v355, %v361
        %v364 = vmul.f32 %v241, %v362
        %365 = vst [vmem:[%s240] sm:$0xff] %v364
        %v367 = vcombine.high %v364, %v364
        %v369 = vsel %vm245, %v364, 0.0
        %v370 = vrot.slane %v369, 4
        %v371 = vadd.f32 %v369, %v370
        %v372 = vrot.slane %v371, 2
        %v373 = vadd.f32 %v371, %v372
        %v374 = vrot.slane %v373, 1
        %v375 = vadd.f32 %v373, %v374
        %v376 = vsel %vm245, %v367, 0.0
        %v377 = vrot.slane %v376, 4
        %v378 = vadd.f32 %v376, %v377
        %v379 = vrot.slane %v378, 2
        %v380 = vadd.f32 %v378, %v379
        %v381 = vrot.slane %v380, 1
        %v382 = vadd.f32 %v380, %v381
        %v383 = vadd.f32 %v375, 0.0
        %v384 = vadd.f32 %v382, 0.0
        %v385 = vsel %vm245, %v364, -inf
        %v386 = vrot.slane %v385, 4
        %v387 = vmax.f32 %v385, %v386
        %v388 = vrot.slane %v387, 2
        %v389 = vmax.f32 %v387, %v388
        %v390 = vrot.slane %v389, 1
        %v391 = vmax.f32 %v389, %v390
        %v392 = vsel %vm245, %v367, -inf
        %v393 = vrot.slane %v392, 4
        %v394 = vmax.f32 %v392, %v393
        %v395 = vrot.slane %v394, 2
        %v396 = vmax.f32 %v394, %v395
        %v397 = vrot.slane %v396, 1
        %v398 = vmax.f32 %v396, %v397
        %v399 = vmul.f32 %v383, 0.25
        %v400 = vmul.f32 %v384, 0.25
        %vm401 = vcmask 1040384
        %v402 = vsel %vm401, %v399, %v391
        %v403 = vsel %vm401, %v400, %v398
        %404 = vrot.lane.b32.xlu0 %v402, 51
        %v405 = vpop.permute.xlu0 %404
        %406 = vrot.lane.b32.xlu0 %v403, 51
        %v407 = vpop.permute.xlu0 %406
        %vm408 = vcmp.lt.s32.totalorder %v308, 51
        %v409 = vsel %vm408, %v405, %v407
        %v410 = vsel %vm408, %v407, %v405
        %v411 = vld [vmem:[#allocation7] sm:$0xf]
        %v414 = vcombine.low %v410, %v409
        %v416 = vunpack.c.l.s4 1983009808
        %v417 = vunpack.c.0.s8 %v416
        %v418 = vlaneseq
        %v419 = vshrl.u32 %v418, 7
        %v420 = vsub.s32 %v417, %v419
        %v421 = vrot.slane %v414, %v420
        %v423 = vmul.f32 %v411, %v421
        %v424 = vadd.f32 %v423, 0.0
        %425 = vrot.lane.b32.xlu0 %v402, 50
        %v426 = vpop.permute.xlu0 %425
        %427 = vrot.lane.b32.xlu0 %v403, 50
        %v428 = vpop.permute.xlu0 %427
        %vm429 = vcmp.lt.s32.totalorder %v308, 50
        %v430 = vsel %vm429, %v426, %v428
        %v431 = vsel %vm429, %v428, %v426
        %s432 = scalar_lea.vmem [#allocation7], 4
        %v433 = vld [vmem:[%s432] sm:$0xf]
        %v436 = vcombine.low %v431, %v430
        %v438 = vunpack.c.l.s4 1983009808
        %v439 = vunpack.c.0.s8 %v438
        %v440 = vlaneseq
        %v441 = vshrl.u32 %v440, 7
        %v442 = vsub.s32 %v439, %v441
        %v443 = vrot.slane %v436, %v442
        %v445 = vmul.f32 %v433, %v443
        %v446 = vadd.f32 %v445, 0.0
        %447 = vrot.lane.b32.xlu0 %v402, 49
        %v448 = vpop.permute.xlu0 %447
        %449 = vrot.lane.b32.xlu0 %v403, 49
        %v450 = vpop.permute.xlu0 %449
        %vm451 = vcmp.lt.s32.totalorder %v308, 49
        %v452 = vsel %vm451, %v448, %v450
        %v453 = vsel %vm451, %v450, %v448
        %s454 = scalar_lea.vmem [#allocation7], 8
        %v455 = vld [vmem:[%s454] sm:$0xf]
        %v458 = vcombine.low %v453, %v452
        %v460 = vunpack.c.l.s4 1983009808
        %v461 = vunpack.c.0.s8 %v460
        %v462 = vlaneseq
        %v463 = vshrl.u32 %v462, 7
        %v464 = vsub.s32 %v461, %v463
        %v465 = vrot.slane %v458, %v464
        %v467 = vmul.f32 %v455, %v465
        %v468 = vadd.f32 %v424, %v467
        %469 = vrot.lane.b32.xlu0 %v402, 48
        %v470 = vpop.permute.xlu0 %469
        %471 = vrot.lane.b32.xlu0 %v403, 48
        %v472 = vpop.permute.xlu0 %471
        %vm473 = vcmp.lt.s32.totalorder %v308, 48
        %v474 = vsel %vm473, %v470, %v472
        %v475 = vsel %vm473, %v472, %v470
        %s476 = scalar_lea.vmem [#allocation7], 12
        %v477 = vld [vmem:[%s476] sm:$0xf]
        %v480 = vcombine.low %v475, %v474
        %v482 = vunpack.c.l.s4 1983009808
        %v483 = vunpack.c.0.s8 %v482
        %v484 = vlaneseq
        %v485 = vshrl.u32 %v484, 7
        %v486 = vsub.s32 %v483, %v485
        %v487 = vrot.slane %v480, %v486
        %v489 = vmul.f32 %v477, %v487
        %v490 = vadd.f32 %v446, %v489
        %491 = vrot.lane.b32.xlu0 %v402, 47
        %v492 = vpop.permute.xlu0 %491
        %493 = vrot.lane.b32.xlu0 %v403, 47
        %v494 = vpop.permute.xlu0 %493
        %vm495 = vcmp.lt.s32.totalorder %v308, 47
        %v496 = vsel %vm495, %v492, %v494
        %v497 = vsel %vm495, %v494, %v492
        %s498 = scalar_lea.vmem [#allocation7], 16
        %v499 = vld [vmem:[%s498] sm:$0xf]
        %v502 = vcombine.low %v497, %v496
        %v504 = vunpack.c.l.s4 1983009808
        %v505 = vunpack.c.0.s8 %v504
        %v506 = vlaneseq
        %v507 = vshrl.u32 %v506, 7
        %v508 = vsub.s32 %v505, %v507
        %v509 = vrot.slane %v502, %v508
        %v511 = vmul.f32 %v499, %v509
        %v512 = vadd.f32 %v468, %v511
        %513 = vrot.lane.b32.xlu0 %v402, 46
        %v514 = vpop.permute.xlu0 %513
        %515 = vrot.lane.b32.xlu0 %v403, 46
        %v516 = vpop.permute.xlu0 %515
        %vm517 = vcmp.lt.s32.totalorder %v308, 46
        %v518 = vsel %vm517, %v514, %v516
        %v519 = vsel %vm517, %v516, %v514
        %s520 = scalar_lea.vmem [#allocation7], 20
        %v521 = vld [vmem:[%s520] sm:$0xf]
        %v524 = vcombine.low %v519, %v518
        %v526 = vunpack.c.l.s4 1983009808
        %v527 = vunpack.c.0.s8 %v526
        %v528 = vlaneseq
        %v529 = vshrl.u32 %v528, 7
        %v530 = vsub.s32 %v527, %v529
        %v531 = vrot.slane %v524, %v530
        %v533 = vmul.f32 %v521, %v531
        %v534 = vadd.f32 %v490, %v533
        %535 = vrot.lane.b32.xlu0 %v402, 45
        %v536 = vpop.permute.xlu0 %535
        %537 = vrot.lane.b32.xlu0 %v403, 45
        %v538 = vpop.permute.xlu0 %537
        %vm539 = vcmp.lt.s32.totalorder %v308, 45
        %v540 = vsel %vm539, %v536, %v538
        %v541 = vsel %vm539, %v538, %v536
        %s542 = scalar_lea.vmem [#allocation7], 24
        %v543 = vld [vmem:[%s542] sm:$0xf]
        %v546 = vcombine.low %v541, %v540
        %v548 = vunpack.c.l.s4 1983009808
        %v549 = vunpack.c.0.s8 %v548
        %v550 = vlaneseq
        %v551 = vshrl.u32 %v550, 7
        %v552 = vsub.s32 %v549, %v551
        %v553 = vrot.slane %v546, %v552
        %v555 = vmul.f32 %v543, %v553
        %v556 = vadd.f32 %v512, %v555
        %557 = vrot.lane.b32.xlu0 %v402, 35
        %v558 = vpop.permute.xlu0 %557
        %559 = vrot.lane.b32.xlu0 %v403, 35
        %v560 = vpop.permute.xlu0 %559
        %vm561 = vcmp.lt.s32.totalorder %v308, 35
        %v562 = vsel %vm561, %v558, %v560
        %v563 = vsel %vm561, %v560, %v558
        %s564 = scalar_lea.vmem [#allocation7], 28
        %v565 = vld [vmem:[%s564] sm:$0xf]
        %v568 = vcombine.low %v563, %v562
        %v570 = vunpack.c.l.s4 1983009808
        %v571 = vunpack.c.0.s8 %v570
        %v572 = vlaneseq
        %v573 = vshrl.u32 %v572, 7
        %v574 = vsub.s32 %v571, %v573
        %v575 = vrot.slane %v568, %v574
        %v577 = vmul.f32 %v565, %v575
        %v578 = vadd.f32 %v534, %v577
        %579 = vrot.lane.b32.xlu0 %v402, 34
        %v580 = vpop.permute.xlu0 %579
        %581 = vrot.lane.b32.xlu0 %v403, 34
        %v582 = vpop.permute.xlu0 %581
        %vm583 = vcmp.lt.s32.totalorder %v308, 34
        %v584 = vsel %vm583, %v580, %v582
        %v585 = vsel %vm583, %v582, %v580
        %s586 = scalar_lea.vmem [#allocation7], 32
        %v587 = vld [vmem:[%s586] sm:$0xf]
        %v590 = vcombine.low %v585, %v584
        %v592 = vunpack.c.l.s4 1983009808
        %v593 = vunpack.c.0.s8 %v592
        %v594 = vlaneseq
        %v595 = vshrl.u32 %v594, 7
        %v596 = vsub.s32 %v593, %v595
        %v597 = vrot.slane %v590, %v596
        %v599 = vmul.f32 %v587, %v597
        %v600 = vadd.f32 %v556, %v599
        %601 = vrot.lane.b32.xlu0 %v402, 33
        %v602 = vpop.permute.xlu0 %601
        %603 = vrot.lane.b32.xlu0 %v403, 33
        %v604 = vpop.permute.xlu0 %603
        %vm605 = vcmp.lt.s32.totalorder %v308, 33
        %v606 = vsel %vm605, %v602, %v604
        %v607 = vsel %vm605, %v604, %v602
        %s608 = scalar_lea.vmem [#allocation7], 36
        %v609 = vld [vmem:[%s608] sm:$0xf]
        %v612 = vcombine.low %v607, %v606
        %v614 = vunpack.c.l.s4 1983009808
        %v615 = vunpack.c.0.s8 %v614
        %v616 = vlaneseq
        %v617 = vshrl.u32 %v616, 7
        %v618 = vsub.s32 %v615, %v617
        %v619 = vrot.slane %v612, %v618
        %v621 = vmul.f32 %v609, %v619
        %v622 = vadd.f32 %v578, %v621
        %623 = vrot.lane.b32.xlu0 %v402, 32
        %v624 = vpop.permute.xlu0 %623
        %625 = vrot.lane.b32.xlu0 %v403, 32
        %v626 = vpop.permute.xlu0 %625
        %vm627 = vcmp.lt.s32.totalorder %v308, 32
        %v628 = vsel %vm627, %v624, %v626
        %v629 = vsel %vm627, %v626, %v624
        %s630 = scalar_lea.vmem [#allocation7], 40
        %v631 = vld [vmem:[%s630] sm:$0xf]
        %v634 = vcombine.low %v629, %v628
        %v636 = vunpack.c.l.s4 1983009808
        %v637 = vunpack.c.0.s8 %v636
        %v638 = vlaneseq
        %v639 = vshrl.u32 %v638, 7
        %v640 = vsub.s32 %v637, %v639
        %v641 = vrot.slane %v634, %v640
        %v643 = vmul.f32 %v631, %v641
        %v644 = vadd.f32 %v600, %v643
        %645 = vrot.lane.b32.xlu0 %v402, 31
        %v646 = vpop.permute.xlu0 %645
        %647 = vrot.lane.b32.xlu0 %v403, 31
        %v648 = vpop.permute.xlu0 %647
        %vm649 = vcmp.lt.s32.totalorder %v308, 31
        %v650 = vsel %vm649, %v646, %v648
        %v651 = vsel %vm649, %v648, %v646
        %s652 = scalar_lea.vmem [#allocation7], 44
        %v653 = vld [vmem:[%s652] sm:$0xf]
        %v656 = vcombine.low %v651, %v650
        %v658 = vunpack.c.l.s4 1983009808
        %v659 = vunpack.c.0.s8 %v658
        %v660 = vlaneseq
        %v661 = vshrl.u32 %v660, 7
        %v662 = vsub.s32 %v659, %v661
        %v663 = vrot.slane %v656, %v662
        %v665 = vmul.f32 %v653, %v663
        %v666 = vadd.f32 %v622, %v665
        %667 = vrot.lane.b32.xlu0 %v402, 30
        %v668 = vpop.permute.xlu0 %667
        %669 = vrot.lane.b32.xlu0 %v403, 30
        %v670 = vpop.permute.xlu0 %669
        %vm671 = vcmp.lt.s32.totalorder %v308, 30
        %v672 = vsel %vm671, %v668, %v670
        %v673 = vsel %vm671, %v670, %v668
        %s674 = scalar_lea.vmem [#allocation7], 48
        %v675 = vld [vmem:[%s674] sm:$0xf]
        %v678 = vcombine.low %v673, %v672
        %v680 = vunpack.c.l.s4 1983009808
        %v681 = vunpack.c.0.s8 %v680
        %v682 = vlaneseq
        %v683 = vshrl.u32 %v682, 7
        %v684 = vsub.s32 %v681, %v683
        %v685 = vrot.slane %v678, %v684
        %v687 = vmul.f32 %v675, %v685
        %v688 = vadd.f32 %v644, %v687
        %689 = vrot.lane.b32.xlu0 %v402, 29
        %v690 = vpop.permute.xlu0 %689
        %691 = vrot.lane.b32.xlu0 %v403, 29
        %v692 = vpop.permute.xlu0 %691
        %vm693 = vcmp.lt.s32.totalorder %v308, 29
        %v694 = vsel %vm693, %v690, %v692
        %v695 = vsel %vm693, %v692, %v690
        %s696 = scalar_lea.vmem [#allocation7], 52
        %v697 = vld [vmem:[%s696] sm:$0xf]
        %v700 = vcombine.low %v695, %v694
        %v702 = vunpack.c.l.s4 1983009808
        %v703 = vunpack.c.0.s8 %v702
        %v704 = vlaneseq
        %v705 = vshrl.u32 %v704, 7
        %v706 = vsub.s32 %v703, %v705
        %v707 = vrot.slane %v700, %v706
        %v709 = vmul.f32 %v697, %v707
        %v710 = vadd.f32 %v666, %v709
        %711 = vrot.lane.b32.xlu0 %v402, 19
        %v712 = vpop.permute.xlu0 %711
        %713 = vrot.lane.b32.xlu0 %v403, 19
        %v714 = vpop.permute.xlu0 %713
        %vm715 = vcmp.lt.s32.totalorder %v308, 19
        %v716 = vsel %vm715, %v712, %v714
        %v717 = vsel %vm715, %v714, %v712
        %s718 = scalar_lea.vmem [#allocation7], 56
        %v719 = vld [vmem:[%s718] sm:$0xf]
        %v722 = vcombine.low %v717, %v716
        %v724 = vunpack.c.l.s4 1983009808
        %v725 = vunpack.c.0.s8 %v724
        %v726 = vlaneseq
        %v727 = vshrl.u32 %v726, 7
        %v728 = vsub.s32 %v725, %v727
        %v729 = vrot.slane %v722, %v728
        %v731 = vmul.f32 %v719, %v729
        %v732 = vadd.f32 %v688, %v731
        %733 = vrot.lane.b32.xlu0 %v402, 18
        %v734 = vpop.permute.xlu0 %733
        %735 = vrot.lane.b32.xlu0 %v403, 18
        %v736 = vpop.permute.xlu0 %735
        %vm737 = vcmp.lt.s32.totalorder %v308, 18
        %v738 = vsel %vm737, %v734, %v736
        %v739 = vsel %vm737, %v736, %v734
        %s740 = scalar_lea.vmem [#allocation7], 60
        %v741 = vld [vmem:[%s740] sm:$0xf]
        %v744 = vcombine.low %v739, %v738
        %v746 = vunpack.c.l.s4 1983009808
        %v747 = vunpack.c.0.s8 %v746
        %v748 = vlaneseq
        %v749 = vshrl.u32 %v748, 7
        %v750 = vsub.s32 %v747, %v749
        %v751 = vrot.slane %v744, %v750
        %v753 = vmul.f32 %v741, %v751
        %v754 = vadd.f32 %v710, %v753
        %755 = vrot.lane.b32.xlu0 %v402, 17
        %v756 = vpop.permute.xlu0 %755
        %757 = vrot.lane.b32.xlu0 %v403, 17
        %v758 = vpop.permute.xlu0 %757
        %vm759 = vcmp.lt.s32.totalorder %v308, 17
        %v760 = vsel %vm759, %v756, %v758
        %v761 = vsel %vm759, %v758, %v756
        %s762 = scalar_lea.vmem [#allocation7], 64
        %v763 = vld [vmem:[%s762] sm:$0xf]
        %v766 = vcombine.low %v761, %v760
        %v768 = vunpack.c.l.s4 1983009808
        %v769 = vunpack.c.0.s8 %v768
        %v770 = vlaneseq
        %v771 = vshrl.u32 %v770, 7
        %v772 = vsub.s32 %v769, %v771
        %v773 = vrot.slane %v766, %v772
        %v775 = vmul.f32 %v763, %v773
        %v776 = vadd.f32 %v732, %v775
        %777 = vrot.lane.b32.xlu0 %v402, 16
        %v778 = vpop.permute.xlu0 %777
        %779 = vrot.lane.b32.xlu0 %v403, 16
        %v780 = vpop.permute.xlu0 %779
        %vm781 = vcmp.lt.s32.totalorder %v308, 16
        %v782 = vsel %vm781, %v778, %v780
        %v783 = vsel %vm781, %v780, %v778
        %s784 = scalar_lea.vmem [#allocation7], 68
        %v785 = vld [vmem:[%s784] sm:$0xf]
        %v788 = vcombine.low %v783, %v782
        %v790 = vunpack.c.l.s4 1983009808
        %v791 = vunpack.c.0.s8 %v790
        %v792 = vlaneseq
        %v793 = vshrl.u32 %v792, 7
        %v794 = vsub.s32 %v791, %v793
        %v795 = vrot.slane %v788, %v794
        %v797 = vmul.f32 %v785, %v795
        %v798 = vadd.f32 %v754, %v797
        %799 = vrot.lane.b32.xlu0 %v402, 15
        %v800 = vpop.permute.xlu0 %799
        %801 = vrot.lane.b32.xlu0 %v403, 15
        %v802 = vpop.permute.xlu0 %801
        %vm803 = vcmp.lt.s32.totalorder %v308, 15
        %v804 = vsel %vm803, %v800, %v802
        %v805 = vsel %vm803, %v802, %v800
        %s806 = scalar_lea.vmem [#allocation7], 72
        %v807 = vld [vmem:[%s806] sm:$0xf]
        %v810 = vcombine.low %v805, %v804
        %v812 = vunpack.c.l.s4 1983009808
        %v813 = vunpack.c.0.s8 %v812
        %v814 = vlaneseq
        %v815 = vshrl.u32 %v814, 7
        %v816 = vsub.s32 %v813, %v815
        %v817 = vrot.slane %v810, %v816
        %v819 = vmul.f32 %v807, %v817
        %v820 = vadd.f32 %v776, %v819
        %821 = vrot.lane.b32.xlu0 %v402, 14
        %v822 = vpop.permute.xlu0 %821
        %823 = vrot.lane.b32.xlu0 %v403, 14
        %v824 = vpop.permute.xlu0 %823
        %vm825 = vcmp.lt.s32.totalorder %v308, 14
        %v826 = vsel %vm825, %v822, %v824
        %v827 = vsel %vm825, %v824, %v822
        %s828 = scalar_lea.vmem [#allocation7], 76
        %v829 = vld [vmem:[%s828] sm:$0xf]
        %v832 = vcombine.low %v827, %v826
        %v834 = vunpack.c.l.s4 1983009808
        %v835 = vunpack.c.0.s8 %v834
        %v836 = vlaneseq
        %v837 = vshrl.u32 %v836, 7
        %v838 = vsub.s32 %v835, %v837
        %v839 = vrot.slane %v832, %v838
        %v841 = vmul.f32 %v829, %v839
        %v842 = vadd.f32 %v798, %v841
        %843 = vrot.lane.b32.xlu0 %v402, 13
        %v844 = vpop.permute.xlu0 %843
        %845 = vrot.lane.b32.xlu0 %v403, 13
        %v846 = vpop.permute.xlu0 %845
        %vm847 = vcmp.lt.s32.totalorder %v308, 13
        %v848 = vsel %vm847, %v844, %v846
        %v849 = vsel %vm847, %v846, %v844
        %s850 = scalar_lea.vmem [#allocation7], 80
        %v851 = vld [vmem:[%s850] sm:$0xf]
        %v854 = vcombine.low %v849, %v848
        %v856 = vunpack.c.l.s4 1983009808
        %v857 = vunpack.c.0.s8 %v856
        %v858 = vlaneseq
        %v859 = vshrl.u32 %v858, 7
        %v860 = vsub.s32 %v857, %v859
        %v861 = vrot.slane %v854, %v860
        %v863 = vmul.f32 %v851, %v861
        %v864 = vadd.f32 %v820, %v863
        %865 = vrot.lane.b32.xlu0 %v402, 3
        %v866 = vpop.permute.xlu0 %865
        %867 = vrot.lane.b32.xlu0 %v403, 3
        %v868 = vpop.permute.xlu0 %867
        %vm869 = vcmp.lt.s32.totalorder %v308, 3
        %v870 = vsel %vm869, %v866, %v868
        %v871 = vsel %vm869, %v868, %v866
        %s872 = scalar_lea.vmem [#allocation7], 84
        %v873 = vld [vmem:[%s872] sm:$0xf]
        %v876 = vcombine.low %v871, %v870
        %v878 = vunpack.c.l.s4 1983009808
        %v879 = vunpack.c.0.s8 %v878
        %v880 = vlaneseq
        %v881 = vshrl.u32 %v880, 7
        %v882 = vsub.s32 %v879, %v881
        %v883 = vrot.slane %v876, %v882
        %v885 = vmul.f32 %v873, %v883
        %v886 = vadd.f32 %v842, %v885
        %887 = vrot.lane.b32.xlu0 %v402, 2
        %v888 = vpop.permute.xlu0 %887
        %889 = vrot.lane.b32.xlu0 %v403, 2
        %v890 = vpop.permute.xlu0 %889
        %vm891 = vcmp.lt.s32.totalorder %v308, 2
        %v892 = vsel %vm891, %v888, %v890
        %v893 = vsel %vm891, %v890, %v888
        %s894 = scalar_lea.vmem [#allocation7], 88
        %v895 = vld [vmem:[%s894] sm:$0xf]
        %v898 = vcombine.low %v893, %v892
        %v900 = vunpack.c.l.s4 1983009808
        %v901 = vunpack.c.0.s8 %v900
        %v902 = vlaneseq
        %v903 = vshrl.u32 %v902, 7
        %v904 = vsub.s32 %v901, %v903
        %v905 = vrot.slane %v898, %v904
        %v907 = vmul.f32 %v895, %v905
        %v908 = vadd.f32 %v864, %v907
        %909 = vrot.lane.b32.xlu0 %v402, 1
        %v910 = vpop.permute.xlu0 %909
        %911 = vrot.lane.b32.xlu0 %v403, 1
        %v912 = vpop.permute.xlu0 %911
        %vm913 = vcmp.lt.s32.totalorder %v308, 1
        %v914 = vsel %vm913, %v910, %v912
        %v915 = vsel %vm913, %v912, %v910
        %s916 = scalar_lea.vmem [#allocation7], 92
        %v917 = vld [vmem:[%s916] sm:$0xf]
        %v920 = vcombine.low %v915, %v914
        %v922 = vunpack.c.l.s4 1983009808
        %v923 = vunpack.c.0.s8 %v922
        %v924 = vlaneseq
        %v925 = vshrl.u32 %v924, 7
        %v926 = vsub.s32 %v923, %v925
        %v927 = vrot.slane %v920, %v926
        %v929 = vmul.f32 %v917, %v927
        %v930 = vadd.f32 %v886, %v929
        %s931 = scalar_lea.vmem [#allocation7], 96
        %v932 = vld [vmem:[%s931] sm:$0xf]
        %v935 = vcombine.low %v402, %v403
        %v937 = vunpack.c.l.s4 1983009808
        %v938 = vunpack.c.0.s8 %v937
        %v939 = vlaneseq
        %v940 = vshrl.u32 %v939, 7
        %v941 = vsub.s32 %v938, %v940
        %v942 = vrot.slane %v935, %v941
        %v944 = vmul.f32 %v932, %v942
        %v945 = vadd.f32 %v908, %v944
        %946 = vrot.lane.b32.xlu0 %v402, 127
        %v947 = vpop.permute.xlu0 %946
        %948 = vrot.lane.b32.xlu0 %v403, 127
        %v949 = vpop.permute.xlu0 %948
        %vm950 = vcmp.lt.s32.totalorder %v308, 127
        %v951 = vsel %vm950, %v947, %v949
        %v952 = vsel %vm950, %v949, %v947
        %s953 = scalar_lea.vmem [#allocation7], 100
        %v954 = vld [vmem:[%s953] sm:$0xf]
        %v957 = vcombine.low %v951, %v952
        %v959 = vunpack.c.l.s4 1983009808
        %v960 = vunpack.c.0.s8 %v959
        %v961 = vlaneseq
        %v962 = vshrl.u32 %v961, 7
        %v963 = vsub.s32 %v960, %v962
        %v964 = vrot.slane %v957, %v963
        %v966 = vmul.f32 %v954, %v964
        %v967 = vadd.f32 %v930, %v966
        %968 = vrot.lane.b32.xlu0 %v402, 126
        %v969 = vpop.permute.xlu0 %968
        %970 = vrot.lane.b32.xlu0 %v403, 126
        %v971 = vpop.permute.xlu0 %970
        %vm972 = vcmp.lt.s32.totalorder %v308, 126
        %v973 = vsel %vm972, %v969, %v971
        %v974 = vsel %vm972, %v971, %v969
        %s975 = scalar_lea.vmem [#allocation7], 104
        %v976 = vld [vmem:[%s975] sm:$0xf]
        %v979 = vcombine.low %v973, %v974
        %v981 = vunpack.c.l.s4 1983009808
        %v982 = vunpack.c.0.s8 %v981
        %v983 = vlaneseq
        %v984 = vshrl.u32 %v983, 7
        %v985 = vsub.s32 %v982, %v984
        %v986 = vrot.slane %v979, %v985
        %v988 = vmul.f32 %v976, %v986
        %v989 = vadd.f32 %v945, %v988
        %990 = vrot.lane.b32.xlu0 %v402, 125
        %v991 = vpop.permute.xlu0 %990
        %992 = vrot.lane.b32.xlu0 %v403, 125
        %v993 = vpop.permute.xlu0 %992
        %vm994 = vcmp.lt.s32.totalorder %v308, 125
        %v995 = vsel %vm994, %v991, %v993
        %v996 = vsel %vm994, %v993, %v991
        %s997 = scalar_lea.vmem [#allocation7], 108
        %v998 = vld [vmem:[%s997] sm:$0xf]
        %v1001 = vcombine.low %v995, %v996
        %v1003 = vunpack.c.l.s4 1983009808
        %v1004 = vunpack.c.0.s8 %v1003
        %v1005 = vlaneseq
        %v1006 = vshrl.u32 %v1005, 7
        %v1007 = vsub.s32 %v1004, %v1006
        %v1008 = vrot.slane %v1001, %v1007
        %v1010 = vmul.f32 %v998, %v1008
        %v1011 = vadd.f32 %v967, %v1010
        %1012 = vrot.lane.b32.xlu0 %v402, 115
        %v1013 = vpop.permute.xlu0 %1012
        %1014 = vrot.lane.b32.xlu0 %v403, 115
        %v1015 = vpop.permute.xlu0 %1014
        %vm1016 = vcmp.lt.s32.totalorder %v308, 115
        %v1017 = vsel %vm1016, %v1013, %v1015
        %v1018 = vsel %vm1016, %v1015, %v1013
        %s1019 = scalar_lea.vmem [#allocation7], 112
        %v1020 = vld [vmem:[%s1019] sm:$0xf]
        %v1023 = vcombine.low %v1017, %v1018
        %v1025 = vunpack.c.l.s4 1983009808
        %v1026 = vunpack.c.0.s8 %v1025
        %v1027 = vlaneseq
        %v1028 = vshrl.u32 %v1027, 7
        %v1029 = vsub.s32 %v1026, %v1028
        %v1030 = vrot.slane %v1023, %v1029
        %v1032 = vmul.f32 %v1020, %v1030
        %v1033 = vadd.f32 %v989, %v1032
        %1034 = vrot.lane.b32.xlu0 %v402, 114
        %v1035 = vpop.permute.xlu0 %1034
        %1036 = vrot.lane.b32.xlu0 %v403, 114
        %v1037 = vpop.permute.xlu0 %1036
        %vm1038 = vcmp.lt.s32.totalorder %v308, 114
        %v1039 = vsel %vm1038, %v1035, %v1037
        %v1040 = vsel %vm1038, %v1037, %v1035
        %s1041 = scalar_lea.vmem [#allocation7], 116
        %v1042 = vld [vmem:[%s1041] sm:$0xf]
        %v1045 = vcombine.low %v1039, %v1040
        %v1047 = vunpack.c.l.s4 1983009808
        %v1048 = vunpack.c.0.s8 %v1047
        %v1049 = vlaneseq
        %v1050 = vshrl.u32 %v1049, 7
        %v1051 = vsub.s32 %v1048, %v1050
        %v1052 = vrot.slane %v1045, %v1051
        %v1054 = vmul.f32 %v1042, %v1052
        %v1055 = vadd.f32 %v1011, %v1054
        %1056 = vrot.lane.b32.xlu0 %v402, 113
        %v1057 = vpop.permute.xlu0 %1056
        %1058 = vrot.lane.b32.xlu0 %v403, 113
        %v1059 = vpop.permute.xlu0 %1058
        %vm1060 = vcmp.lt.s32.totalorder %v308, 113
        %v1061 = vsel %vm1060, %v1057, %v1059
        %v1062 = vsel %vm1060, %v1059, %v1057
        %s1063 = scalar_lea.vmem [#allocation7], 120
        %v1064 = vld [vmem:[%s1063] sm:$0xf]
        %v1067 = vcombine.low %v1061, %v1062
        %v1069 = vunpack.c.l.s4 1983009808
        %v1070 = vunpack.c.0.s8 %v1069
        %v1071 = vlaneseq
        %v1072 = vshrl.u32 %v1071, 7
        %v1073 = vsub.s32 %v1070, %v1072
        %v1074 = vrot.slane %v1067, %v1073
        %v1076 = vmul.f32 %v1064, %v1074
        %v1077 = vadd.f32 %v1033, %v1076
        %1078 = vrot.lane.b32.xlu0 %v402, 112
        %v1079 = vpop.permute.xlu0 %1078
        %1080 = vrot.lane.b32.xlu0 %v403, 112
        %v1081 = vpop.permute.xlu0 %1080
        %vm1082 = vcmp.lt.s32.totalorder %v308, 112
        %v1083 = vsel %vm1082, %v1079, %v1081
        %v1084 = vsel %vm1082, %v1081, %v1079
        %s1085 = scalar_lea.vmem [#allocation7], 124
        %v1086 = vld [vmem:[%s1085] sm:$0xf]
        %v1089 = vcombine.low %v1083, %v1084
        %v1091 = vunpack.c.l.s4 1983009808
        %v1092 = vunpack.c.0.s8 %v1091
        %v1093 = vlaneseq
        %v1094 = vshrl.u32 %v1093, 7
        %v1095 = vsub.s32 %v1092, %v1094
        %v1096 = vrot.slane %v1089, %v1095
        %v1098 = vmul.f32 %v1086, %v1096
        %v1099 = vadd.f32 %v1055, %v1098
        %1100 = vrot.lane.b32.xlu0 %v402, 111
        %v1101 = vpop.permute.xlu0 %1100
        %1102 = vrot.lane.b32.xlu0 %v403, 111
        %v1103 = vpop.permute.xlu0 %1102
        %vm1104 = vcmp.lt.s32.totalorder %v308, 111
        %v1105 = vsel %vm1104, %v1101, %v1103
        %v1106 = vsel %vm1104, %v1103, %v1101
        %s1107 = scalar_lea.vmem [#allocation7], 128
        %v1108 = vld [vmem:[%s1107] sm:$0xf]
        %v1111 = vcombine.low %v1105, %v1106
        %v1113 = vunpack.c.l.s4 1983009808
        %v1114 = vunpack.c.0.s8 %v1113
        %v1115 = vlaneseq
        %v1116 = vshrl.u32 %v1115, 7
        %v1117 = vsub.s32 %v1114, %v1116
        %v1118 = vrot.slane %v1111, %v1117
        %v1120 = vmul.f32 %v1108, %v1118
        %v1121 = vadd.f32 %v1077, %v1120
        %1122 = vrot.lane.b32.xlu0 %v402, 110
        %v1123 = vpop.permute.xlu0 %1122
        %1124 = vrot.lane.b32.xlu0 %v403, 110
        %v1125 = vpop.permute.xlu0 %1124
        %vm1126 = vcmp.lt.s32.totalorder %v308, 110
        %v1127 = vsel %vm1126, %v1123, %v1125
        %v1128 = vsel %vm1126, %v1125, %v1123
        %s1129 = scalar_lea.vmem [#allocation7], 132
        %v1130 = vld [vmem:[%s1129] sm:$0xf]
        %v1133 = vcombine.low %v1127, %v1128
        %v1135 = vunpack.c.l.s4 1983009808
        %v1136 = vunpack.c.0.s8 %v1135
        %v1137 = vlaneseq
        %v1138 = vshrl.u32 %v1137, 7
        %v1139 = vsub.s32 %v1136, %v1138
        %v1140 = vrot.slane %v1133, %v1139
        %v1142 = vmul.f32 %v1130, %v1140
        %v1143 = vadd.f32 %v1099, %v1142
        %1144 = vrot.lane.b32.xlu0 %v402, 109
        %v1145 = vpop.permute.xlu0 %1144
        %1146 = vrot.lane.b32.xlu0 %v403, 109
        %v1147 = vpop.permute.xlu0 %1146
        %vm1148 = vcmp.lt.s32.totalorder %v308, 109
        %v1149 = vsel %vm1148, %v1145, %v1147
        %v1150 = vsel %vm1148, %v1147, %v1145
        %s1151 = scalar_lea.vmem [#allocation7], 136
        %v1152 = vld [vmem:[%s1151] sm:$0xf]
        %v1155 = vcombine.low %v1149, %v1150
        %v1157 = vunpack.c.l.s4 1983009808
        %v1158 = vunpack.c.0.s8 %v1157
        %v1159 = vlaneseq
        %v1160 = vshrl.u32 %v1159, 7
        %v1161 = vsub.s32 %v1158, %v1160
        %v1162 = vrot.slane %v1155, %v1161
        %v1164 = vmul.f32 %v1152, %v1162
        %v1165 = vadd.f32 %v1121, %v1164
        %1166 = vrot.lane.b32.xlu0 %v402, 99
        %v1167 = vpop.permute.xlu0 %1166
        %1168 = vrot.lane.b32.xlu0 %v403, 99
        %v1169 = vpop.permute.xlu0 %1168
        %vm1170 = vcmp.lt.s32.totalorder %v308, 99
        %v1171 = vsel %vm1170, %v1167, %v1169
        %v1172 = vsel %vm1170, %v1169, %v1167
        %s1173 = scalar_lea.vmem [#allocation7], 140
        %v1174 = vld [vmem:[%s1173] sm:$0xf]
        %v1177 = vcombine.low %v1171, %v1172
        %v1179 = vunpack.c.l.s4 1983009808
        %v1180 = vunpack.c.0.s8 %v1179
        %v1181 = vlaneseq
        %v1182 = vshrl.u32 %v1181, 7
        %v1183 = vsub.s32 %v1180, %v1182
        %v1184 = vrot.slane %v1177, %v1183
        %v1186 = vmul.f32 %v1174, %v1184
        %v1187 = vadd.f32 %v1143, %v1186
        %1188 = vrot.lane.b32.xlu0 %v402, 98
        %v1189 = vpop.permute.xlu0 %1188
        %1190 = vrot.lane.b32.xlu0 %v403, 98
        %v1191 = vpop.permute.xlu0 %1190
        %vm1192 = vcmp.lt.s32.totalorder %v308, 98
        %v1193 = vsel %vm1192, %v1189, %v1191
        %v1194 = vsel %vm1192, %v1191, %v1189
        %s1195 = scalar_lea.vmem [#allocation7], 144
        %v1196 = vld [vmem:[%s1195] sm:$0xf]
        %v1199 = vcombine.low %v1193, %v1194
        %v1201 = vunpack.c.l.s4 1983009808
        %v1202 = vunpack.c.0.s8 %v1201
        %v1203 = vlaneseq
        %v1204 = vshrl.u32 %v1203, 7
        %v1205 = vsub.s32 %v1202, %v1204
        %v1206 = vrot.slane %v1199, %v1205
        %v1208 = vmul.f32 %v1196, %v1206
        %v1209 = vadd.f32 %v1165, %v1208
        %1210 = vrot.lane.b32.xlu0 %v402, 97
        %v1211 = vpop.permute.xlu0 %1210
        %1212 = vrot.lane.b32.xlu0 %v403, 97
        %v1213 = vpop.permute.xlu0 %1212
        %vm1214 = vcmp.lt.s32.totalorder %v308, 97
        %v1215 = vsel %vm1214, %v1211, %v1213
        %v1216 = vsel %vm1214, %v1213, %v1211
        %s1217 = scalar_lea.vmem [#allocation7], 148
        %v1218 = vld [vmem:[%s1217] sm:$0xf]
        %v1221 = vcombine.low %v1215, %v1216
        %v1223 = vunpack.c.l.s4 1983009808
        %v1224 = vunpack.c.0.s8 %v1223
        %v1225 = vlaneseq
        %v1226 = vshrl.u32 %v1225, 7
        %v1227 = vsub.s32 %v1224, %v1226
        %v1228 = vrot.slane %v1221, %v1227
        %v1230 = vmul.f32 %v1218, %v1228
        %v1231 = vadd.f32 %v1187, %v1230
        %1232 = vrot.lane.b32.xlu0 %v402, 96
        %v1233 = vpop.permute.xlu0 %1232
        %1234 = vrot.lane.b32.xlu0 %v403, 96
        %v1235 = vpop.permute.xlu0 %1234
        %vm1236 = vcmp.lt.s32.totalorder %v308, 96
        %v1237 = vsel %vm1236, %v1233, %v1235
        %v1238 = vsel %vm1236, %v1235, %v1233
        %s1239 = scalar_lea.vmem [#allocation7], 152
        %v1240 = vld [vmem:[%s1239] sm:$0xf]
        %v1243 = vcombine.low %v1237, %v1238
        %v1245 = vunpack.c.l.s4 1983009808
        %v1246 = vunpack.c.0.s8 %v1245
        %v1247 = vlaneseq
        %v1248 = vshrl.u32 %v1247, 7
        %v1249 = vsub.s32 %v1246, %v1248
        %v1250 = vrot.slane %v1243, %v1249
        %v1252 = vmul.f32 %v1240, %v1250
        %v1253 = vadd.f32 %v1209, %v1252
        %1254 = vrot.lane.b32.xlu0 %v402, 95
        %v1255 = vpop.permute.xlu0 %1254
        %1256 = vrot.lane.b32.xlu0 %v403, 95
        %v1257 = vpop.permute.xlu0 %1256
        %vm1258 = vcmp.lt.s32.totalorder %v308, 95
        %v1259 = vsel %vm1258, %v1255, %v1257
        %v1260 = vsel %vm1258, %v1257, %v1255
        %s1261 = scalar_lea.vmem [#allocation7], 156
        %v1262 = vld [vmem:[%s1261] sm:$0xf]
        %v1265 = vcombine.low %v1259, %v1260
        %v1267 = vunpack.c.l.s4 1983009808
        %v1268 = vunpack.c.0.s8 %v1267
        %v1269 = vlaneseq
        %v1270 = vshrl.u32 %v1269, 7
        %v1271 = vsub.s32 %v1268, %v1270
        %v1272 = vrot.slane %v1265, %v1271
        %v1274 = vmul.f32 %v1262, %v1272
        %v1275 = vadd.f32 %v1231, %v1274
        %1276 = vrot.lane.b32.xlu0 %v402, 94
        %v1277 = vpop.permute.xlu0 %1276
        %1278 = vrot.lane.b32.xlu0 %v403, 94
        %v1279 = vpop.permute.xlu0 %1278
        %vm1280 = vcmp.lt.s32.totalorder %v308, 94
        %v1281 = vsel %vm1280, %v1277, %v1279
        %v1282 = vsel %vm1280, %v1279, %v1277
        %s1283 = scalar_lea.vmem [#allocation7], 160
        %v1284 = vld [vmem:[%s1283] sm:$0xf]
        %v1287 = vcombine.low %v1281, %v1282
        %v1289 = vunpack.c.l.s4 1983009808
        %v1290 = vunpack.c.0.s8 %v1289
        %v1291 = vlaneseq
        %v1292 = vshrl.u32 %v1291, 7
        %v1293 = vsub.s32 %v1290, %v1292
        %v1294 = vrot.slane %v1287, %v1293
        %v1296 = vmul.f32 %v1284, %v1294
        %v1297 = vadd.f32 %v1253, %v1296
        %1298 = vrot.lane.b32.xlu0 %v402, 93
        %v1299 = vpop.permute.xlu0 %1298
        %1300 = vrot.lane.b32.xlu0 %v403, 93
        %v1301 = vpop.permute.xlu0 %1300
        %vm1302 = vcmp.lt.s32.totalorder %v308, 93
        %v1303 = vsel %vm1302, %v1299, %v1301
        %v1304 = vsel %vm1302, %v1301, %v1299
        %s1305 = scalar_lea.vmem [#allocation7], 164
        %v1306 = vld [vmem:[%s1305] sm:$0xf]
        %v1309 = vcombine.low %v1303, %v1304
        %v1311 = vunpack.c.l.s4 1983009808
        %v1312 = vunpack.c.0.s8 %v1311
        %v1313 = vlaneseq
        %v1314 = vshrl.u32 %v1313, 7
        %v1315 = vsub.s32 %v1312, %v1314
        %v1316 = vrot.slane %v1309, %v1315
        %v1318 = vmul.f32 %v1306, %v1316
        %v1319 = vadd.f32 %v1275, %v1318
        %1320 = vrot.lane.b32.xlu0 %v402, 83
        %v1321 = vpop.permute.xlu0 %1320
        %1322 = vrot.lane.b32.xlu0 %v403, 83
        %v1323 = vpop.permute.xlu0 %1322
        %vm1324 = vcmp.lt.s32.totalorder %v308, 83
        %v1325 = vsel %vm1324, %v1321, %v1323
        %v1326 = vsel %vm1324, %v1323, %v1321
        %s1327 = scalar_lea.vmem [#allocation7], 168
        %v1328 = vld [vmem:[%s1327] sm:$0xf]
        %v1331 = vcombine.low %v1325, %v1326
        %v1333 = vunpack.c.l.s4 1983009808
        %v1334 = vunpack.c.0.s8 %v1333
        %v1335 = vlaneseq
        %v1336 = vshrl.u32 %v1335, 7
        %v1337 = vsub.s32 %v1334, %v1336
        %v1338 = vrot.slane %v1331, %v1337
        %v1340 = vmul.f32 %v1328, %v1338
        %v1341 = vadd.f32 %v1297, %v1340
        %1342 = vrot.lane.b32.xlu0 %v402, 82
        %v1343 = vpop.permute.xlu0 %1342
        %1344 = vrot.lane.b32.xlu0 %v403, 82
        %v1345 = vpop.permute.xlu0 %1344
        %vm1346 = vcmp.lt.s32.totalorder %v308, 82
        %v1347 = vsel %vm1346, %v1343, %v1345
        %v1348 = vsel %vm1346, %v1345, %v1343
        %s1349 = scalar_lea.vmem [#allocation7], 172
        %v1350 = vld [vmem:[%s1349] sm:$0xf]
        %v1353 = vcombine.low %v1347, %v1348
        %v1355 = vunpack.c.l.s4 1983009808
        %v1356 = vunpack.c.0.s8 %v1355
        %v1357 = vlaneseq
        %v1358 = vshrl.u32 %v1357, 7
        %v1359 = vsub.s32 %v1356, %v1358
        %v1360 = vrot.slane %v1353, %v1359
        %v1362 = vmul.f32 %v1350, %v1360
        %v1363 = vadd.f32 %v1319, %v1362
        %1364 = vrot.lane.b32.xlu0 %v402, 81
        %v1365 = vpop.permute.xlu0 %1364
        %1366 = vrot.lane.b32.xlu0 %v403, 81
        %v1367 = vpop.permute.xlu0 %1366
        %vm1368 = vcmp.lt.s32.totalorder %v308, 81
        %v1369 = vsel %vm1368, %v1365, %v1367
        %v1370 = vsel %vm1368, %v1367, %v1365
        %s1371 = scalar_lea.vmem [#allocation7], 176
        %v1372 = vld [vmem:[%s1371] sm:$0xf]
        %v1375 = vcombine.low %v1369, %v1370
        %v1377 = vunpack.c.l.s4 1983009808
        %v1378 = vunpack.c.0.s8 %v1377
        %v1379 = vlaneseq
        %v1380 = vshrl.u32 %v1379, 7
        %v1381 = vsub.s32 %v1378, %v1380
        %v1382 = vrot.slane %v1375, %v1381
        %v1384 = vmul.f32 %v1372, %v1382
        %v1385 = vadd.f32 %v1341, %v1384
        %1386 = vrot.lane.b32.xlu0 %v402, 80
        %v1387 = vpop.permute.xlu0 %1386
        %1388 = vrot.lane.b32.xlu0 %v403, 80
        %v1389 = vpop.permute.xlu0 %1388
        %vm1390 = vcmp.lt.s32.totalorder %v308, 80
        %v1391 = vsel %vm1390, %v1387, %v1389
        %v1392 = vsel %vm1390, %v1389, %v1387
        %s1393 = scalar_lea.vmem [#allocation7], 180
        %v1394 = vld [vmem:[%s1393] sm:$0xf]
        %v1397 = vcombine.low %v1391, %v1392
        %v1399 = vunpack.c.l.s4 1983009808
        %v1400 = vunpack.c.0.s8 %v1399
        %v1401 = vlaneseq
        %v1402 = vshrl.u32 %v1401, 7
        %v1403 = vsub.s32 %v1400, %v1402
        %v1404 = vrot.slane %v1397, %v1403
        %v1406 = vmul.f32 %v1394, %v1404
        %v1407 = vadd.f32 %v1363, %v1406
        %1408 = vrot.lane.b32.xlu0 %v402, 79
        %v1409 = vpop.permute.xlu0 %1408
        %1410 = vrot.lane.b32.xlu0 %v403, 79
        %v1411 = vpop.permute.xlu0 %1410
        %vm1412 = vcmp.lt.s32.totalorder %v308, 79
        %v1413 = vsel %vm1412, %v1409, %v1411
        %v1414 = vsel %vm1412, %v1411, %v1409
        %s1415 = scalar_lea.vmem [#allocation7], 184
        %v1416 = vld [vmem:[%s1415] sm:$0xf]
        %v1419 = vcombine.low %v1413, %v1414
        %v1421 = vunpack.c.l.s4 1983009808
        %v1422 = vunpack.c.0.s8 %v1421
        %v1423 = vlaneseq
        %v1424 = vshrl.u32 %v1423, 7
        %v1425 = vsub.s32 %v1422, %v1424
        %v1426 = vrot.slane %v1419, %v1425
        %v1428 = vmul.f32 %v1416, %v1426
        %v1429 = vadd.f32 %v1385, %v1428
        %1430 = vrot.lane.b32.xlu0 %v402, 78
        %v1431 = vpop.permute.xlu0 %1430
        %1432 = vrot.lane.b32.xlu0 %v403, 78
        %v1433 = vpop.permute.xlu0 %1432
        %vm1434 = vcmp.lt.s32.totalorder %v308, 78
        %v1435 = vsel %vm1434, %v1431, %v1433
        %v1436 = vsel %vm1434, %v1433, %v1431
        %s1437 = scalar_lea.vmem [#allocation7], 188
        %v1438 = vld [vmem:[%s1437] sm:$0xf]
        %v1441 = vcombine.low %v1435, %v1436
        %v1443 = vunpack.c.l.s4 1983009808
        %v1444 = vunpack.c.0.s8 %v1443
        %v1445 = vlaneseq
        %v1446 = vshrl.u32 %v1445, 7
        %v1447 = vsub.s32 %v1444, %v1446
        %v1448 = vrot.slane %v1441, %v1447
        %v1450 = vmul.f32 %v1438, %v1448
        %v1451 = vadd.f32 %v1407, %v1450
        %1452 = vrot.lane.b32.xlu0 %v402, 77
        %v1453 = vpop.permute.xlu0 %1452
        %1454 = vrot.lane.b32.xlu0 %v403, 77
        %v1455 = vpop.permute.xlu0 %1454
        %vm1456 = vcmp.lt.s32.totalorder %v308, 77
        %v1457 = vsel %vm1456, %v1453, %v1455
        %v1458 = vsel %vm1456, %v1455, %v1453
        %s1459 = scalar_lea.vmem [#allocation7], 192
        %v1460 = vld [vmem:[%s1459] sm:$0xf]
        %v1463 = vcombine.low %v1457, %v1458
        %v1465 = vunpack.c.l.s4 1983009808
        %v1466 = vunpack.c.0.s8 %v1465
        %v1467 = vlaneseq
        %v1468 = vshrl.u32 %v1467, 7
        %v1469 = vsub.s32 %v1466, %v1468
        %v1470 = vrot.slane %v1463, %v1469
        %v1472 = vmul.f32 %v1460, %v1470
        %v1473 = vadd.f32 %v1429, %v1472
        %v1474 = vadd.f32 %v1473, %v1451
        %v1476 = vrot.slane %v1474, 7
        %v1477 = vrot.slane %v1476, 2
        %v1479 = vadd.f32 %v1474, %v1477
        %v1480 = vsub.f32 0.0, %v1479
        %v1481 = vmul.f32 %v1480, 1.442695
        %v1482 = vpow.pop %v1481
        %v1483 = vadd.f32 %v1482, 1.0
        %v1484 = vrcp.pop %v1483
        %v1485 = vld [vmem:[%s240] sm:$0xff]
        %v1487 = vlaneseq
        %v1488 = vshrl.u32 %v1487, 7
        %v1489 = vsub.s32 0, %v1488
        %v1490 = vrot.slane %v1484, %v1489
        %v1491 = vlaneseq
        %v1492 = vshrl.u32 %v1491, 7
        %v1493 = vsub.s32 2, %v1492
        %v1494 = vrot.slane %v1484, %v1493
        %v1497 = vlaneseq
        %v1498 = vshrl.u32 %v1497, 7
        %v1499 = vsub.s32 0, %v1498
        %v1500 = vrot.slane %v1490, %v1499
        %v1501 = vlaneseq
        %v1502 = vshrl.u32 %v1501, 7
        %v1503 = vsub.s32 0, %v1502
        %v1504 = vrot.slane %v1494, %v1503
        %v1507 = vcombine.low %v1500, %v1504
        %v1509 = vmul.f32 %v1485, %v1507
        %1510 = vst [vmem:[%s240] sm:$0xff] %v1509
        %s1511 = sand.u32 %s119, 1
        %s1512 = scalar_lea.sflag [#allocation4], %s1511
        %s1513 = sand.u32 %s119, 1
        %s1514 = smul.addr %s1513, 8
        %s1515 = scalar_lea.vmem [#allocation8], %s1514
        // Predicated region
        $region49: #{tpu_custom_call.1} parent=35 // pred_check
          %p1516 = pneg %p129
        $region50: #{tpu_custom_call.1} parent=35 // pred_check_branch
          %1518 = sbr.rel (%p1516) target = $region52
        $region51: #{tpu_custom_call.1} parent=35 // pred_region
          %s1520 = ssub.s32 128, 128
          %1521 = vsyncadd %s1512, %s1520
          %s1522 = smul.addr %s22, 2
          %s1523 = smul.addr %s1522, 64
          %s1524 = scalar_lea.hbm %s4, %s1523
          %s1526 = sshll.u32 %s1515, 4
          %s1527 = int_to_ptr.vmem [resolvable:$true] %s1526
          %1529 = dma.vmem_to_hbm [thread:$0]  %s1527, 128, %s1524, %s1512
        $region52: #{tpu_custom_call.1} parent=35 // pred_fallthru
          _
      $region36: #{tpu_custom_call.1} parent=5 // pred_fallthru
        _
      %p1530 = scmp.le.s32.totalorder 2, %s17
      // Predicated region
      $region53: #{tpu_custom_call.1} parent=5 // pred_check
        %p1531 = pneg %p1530
      $region54: #{tpu_custom_call.1} parent=5 // pred_check_branch
        %1533 = sbr.rel (%p1531) target = $region56
      $region55: #{tpu_custom_call.1} parent=5 // pred_region
        %s1534 = ssub.s32 %s17, 2
        // Predicated region
        $region57: #{tpu_custom_call.1} parent=55 // pred_check
          %p1535 = pneg %p135
        $region58: #{tpu_custom_call.1} parent=55 // pred_check_branch
          %1537 = sbr.rel (%p1535) target = $region60
        $region59: #{tpu_custom_call.1} parent=55 // pred_region
          %s1538 = sand.u32 %s120, 1
          %s1539 = scalar_lea.sflag [#allocation4], %s1538
          %s1540 = sand.u32 %s120, 1
          %s1541 = smul.addr %s1540, 8
          %s1542 = scalar_lea.vmem [#allocation8], %s1541
          %1543 = dma.done %s1539, 128
        $region60: #{tpu_custom_call.1} parent=55 // pred_fallthru
          _
      $region56: #{tpu_custom_call.1} parent=5 // pred_fallthru
        _
    $region6: #{tpu_custom_call.1} parent=1 // loop_footer
      %s21 = sadd.s32 1, %s17
    $region7: #{tpu_custom_call.1} parent=1 // loop_footer_branch
      %16 = sbr.rel target = $region3
    $region8: #{tpu_custom_call.1} parent=1 // loop_exit
      _
    %1544 = vsyncpa [#allocation3], 1
    %s1545 = scalar_lea.sflag [#allocation3], 1
    %1546 = vsyncpa %s1545, 1
    %1547 = vsyncpa [#allocation6], 1
    %1548 = vsyncpa [#allocation4], 1
    %s1549 = scalar_lea.sflag [#allocation4], 1
    %1550 = vsyncpa %s1549, 1

</llo_original>
